<compile_context>
chip_gen: v7x
topology: tpu7x:2x2x1
jax: 0.10.0
libtpu: 0.0.40
codegen_flags: <defaults>
</compile_context>

<pallas_src>
import jax
import jax.numpy as jnp
import numpy as np
from jax.experimental import pallas as pl
from jax.experimental.pallas import tpu as pltpu


def dma_copy_kernel(x_hbm_ref, o_hbm_ref):
    # Single HBM->HBM DMA: no VMEM staging, no vector load/store stream.
    def body(sem):
        cp = pltpu.make_async_copy(x_hbm_ref, o_hbm_ref, sem)
        cp.start()
        cp.wait()

    pl.run_scoped(body, pltpu.SemaphoreType.DMA)


def channel_view(x, n, h, w):
    """Equivalent of torch `x.view(n, -1, h, w)` for a contiguous tensor."""
    total = 1
    for d in x.shape:
        total *= d
    assert total % (n * h * w) == 0, (
        f"cannot view shape {x.shape} as ({n}, -1, {h}, {w})"
    )
    c_out = total // (n * h * w)
    out_shape = (n, c_out, h, w)

    # Free metadata reshape; DMA src/dst must have matching shapes.
    x4d = jnp.reshape(x, out_shape)

    itemsize = jnp.dtype(x.dtype).itemsize
    return pl.pallas_call(
        dma_copy_kernel,
        out_shape=jax.ShapeDtypeStruct(out_shape, x.dtype),
        in_specs=[pl.BlockSpec(memory_space=pl.ANY)],
        out_specs=pl.BlockSpec(memory_space=pl.ANY),
        cost_estimate=pl.CostEstimate(
            flops=0, transcendentals=0, bytes_accessed=2 * total * itemsize
        ),
    )(x4d)


if __name__ == "__main__":
    # Module constants: x198 = 1 (batch), x200 = x201 = 14 (spatial).
    x198, x200, x201 = 1, 14, 14

    key = jax.random.PRNGKey(0)
    # x205: [1, 176, 2, 14, 14], same as the PyTorch module.
    x205 = jax.random.normal(key, (1, 176, 2, 14, 14), dtype=jnp.float32)

    out = channel_view(x205, x198, x200, x201)
    out = jax.block_until_ready(out)

    # Reference: plain JAX reshape == torch .view on a contiguous tensor.
    ref = jnp.reshape(x205, (x198, -1, x200, x201))
    assert out.shape == (1, 352, 14, 14), out.shape
    np.testing.assert_allclose(np.asarray(out), np.asarray(ref), rtol=0, atol=0)

    print("KERNEL_OK")
</pallas_src>

<mosaic_0001>
module attributes {stable_mosaic.version = 11 : i64} {
  func.func @dma_copy_kernel(%arg0: memref<1x352x14x14xf32, #tpu.memory_space<any>>, %arg1: memref<1x352x14x14xf32, #tpu.memory_space<any>>) attributes {dimension_semantics = [], scalar_prefetch = 0 : i64, scratch_operands = 0 : i64, tpu.core_type = #tpu.core_type<tc>} {
    "tpu.region"() ({
      %0 = tpu.sem_alloc : memref<!tpu.dma_semaphore, #tpu.memory_space<semaphore_mem>>
      tpu.enqueue_dma source(%arg0 : memref<1x352x14x14xf32, #tpu.memory_space<any>>) target(%arg1 : memref<1x352x14x14xf32, #tpu.memory_space<any>>) target_semaphore(%0 : memref<!tpu.dma_semaphore, #tpu.memory_space<semaphore_mem>>)
      tpu.wait_dma2 semaphore(%0 : memref<!tpu.dma_semaphore, #tpu.memory_space<semaphore_mem>>) src(%arg0 : memref<1x352x14x14xf32, #tpu.memory_space<any>>) dst(%arg1 : memref<1x352x14x14xf32, #tpu.memory_space<any>>)
      tpu.yield
    }) : () -> ()
    return
  }
}

</mosaic_0001>

<llo_original>
// kernel: tpu_custom_call.1
$region0: #{tpu_custom_call.1}
  #allocation0 [shape = 'u32[]', space=smem, size = 0x4, offset = 0x4, fixed_abs, tag = 'smem constant byte address 0x4 - core index']
  #allocation1 [shape = 'u32[144,128]{1,0:T(1,128)}', space=vmem, size = 0x12000, scoped, tag = 'internal scratch']
  #allocation3 [shape = 's32[]', space=sflag, size = 0x4, offset = 0, fixed_abs, tag = 'sflag constant byte address 0x0 - dummy sync flag']
  %s0 = inlined_call_operand.vmem [shape: f32[1,352,14,14], index: 0, kind: input, shape index: {}]
  %s1 = inlined_call_operand.vmem [shape: f32[1,352,14,14], index: 1, kind: output, shape index: {}]
  %s2 = sld [smem:[#allocation0]]
  $region40: #{tpu_custom_call.1} parent=0
    _
  %s4 = ssub.s32 1, %s2
  %s5 = scalar_select 0, %s4, %s2
  $region2: #{tpu_custom_call.1} parent=0
    #allocation2 [shape = 's32[1]{0}', space=sflag, size = 0x4, scoped, tag = 'scoped memory for tpu_custom_call.1']
    %p7 = scmp.lt.u32.totalorder 14, 8
    %p8 = pneg %p7
    // Predicated region
    $region3: #{tpu_custom_call.1} parent=2 // pred_check
      _
    $region4: #{tpu_custom_call.1} parent=2 // pred_check_branch
      %10 = sbr.rel (%p7) target = $region6
    $region5: #{tpu_custom_call.1} parent=2 // pred_region
      %s727 = sand.u32 14, 7
      %p728 = scmp.eq.s32.totalorder %s727, 0
      %p729 = pneg %p728
      // Predicated region
      $region18: #{tpu_custom_call.1} parent=5 // pred_check
        _
      $region19: #{tpu_custom_call.1} parent=5 // pred_check_branch
        %731 = sbr.rel (%p728) target = $region21
      $region20: #{tpu_custom_call.1} parent=5 // pred_region
        %s732 = sand.u32 14, 7
        %s733 = ssub.s32 14, %s732
        %s734 = scalar_lea.vmem %s0, %s733
        %s735 = ssub.s32 14, %s732
        %s736 = scalar_lea.vmem %s1, %s735
        loop: start=0, step=1, limit=1
        $region22: #{tpu_custom_call.1} parent=20 // loop_pre_header
          _
        $region23: #{tpu_custom_call.1} parent=20 // loop_header
          %s738 = sphi 0, %s742
          %p739 = scmp.ge.s32.totalorder %s738, 1
          %s743 = sphi %s0, %s0
          %s744 = sphi %s1, %s1
        $region24: #{tpu_custom_call.1} parent=20 // loop_header_branch
          %741 = sbr.rel (%p739) target = $region28
        $region25: #{tpu_custom_call.1} parent=20 // loop_body
          %v745 = vld [vmem:[%s743] sm:$0xff]
          %746 = vst [vmem:[%s744] sm:$0xff] %v745
          %v747 = vld [vmem:[%s743 + $0x10] sm:$0xff]
          %748 = vst [vmem:[%s744 + $0x10] sm:$0xff] %v747
          %v749 = vld [vmem:[%s743 + $0x20] sm:$0xff]
          %750 = vst [vmem:[%s744 + $0x20] sm:$0xff] %v749
          %v751 = vld [vmem:[%s743 + $0x30] sm:$0xff]
          %752 = vst [vmem:[%s744 + $0x30] sm:$0xff] %v751
          %v753 = vld [vmem:[%s743 + $0x40] sm:$0xff]
          %754 = vst [vmem:[%s744 + $0x40] sm:$0xff] %v753
          %v755 = vld [vmem:[%s743 + $0x50] sm:$0xff]
          %756 = vst [vmem:[%s744 + $0x50] sm:$0xff] %v755
          %v757 = vld [vmem:[%s743 + $0x60] sm:$0xff]
          %758 = vst [vmem:[%s744 + $0x60] sm:$0xff] %v757
          %v759 = vld [vmem:[%s743 + $0x70] sm:$0xff]
          %760 = vst [vmem:[%s744 + $0x70] sm:$0xff] %v759
          %v761 = vld [vmem:[%s743 + $0x80] sm:$0xff]
          %762 = vst [vmem:[%s744 + $0x80] sm:$0xff] %v761
          %v763 = vld [vmem:[%s743 + $0x90] sm:$0xff]
          %764 = vst [vmem:[%s744 + $0x90] sm:$0xff] %v763
          %v765 = vld [vmem:[%s743 + $0xa0] sm:$0xff]
          %766 = vst [vmem:[%s744 + $0xa0] sm:$0xff] %v765
          %v767 = vld [vmem:[%s743 + $0xb0] sm:$0xff]
          %768 = vst [vmem:[%s744 + $0xb0] sm:$0xff] %v767
          %v769 = vld [vmem:[%s743 + $0xc0] sm:$0xff]
          %770 = vst [vmem:[%s744 + $0xc0] sm:$0xff] %v769
          %v771 = vld [vmem:[%s743 + $0xd0] sm:$0xff]
          %772 = vst [vmem:[%s744 + $0xd0] sm:$0xff] %v771
          %v773 = vld [vmem:[%s743 + $0xe0] sm:$0xff]
          %774 = vst [vmem:[%s744 + $0xe0] sm:$0xff] %v773
          %v775 = vld [vmem:[%s743 + $0xf0] sm:$0xff]
          %776 = vst [vmem:[%s744 + $0xf0] sm:$0xff] %v775
          %v777 = vld [vmem:[%s743 + $0x100] sm:$0xff]
          %778 = vst [vmem:[%s744 + $0x100] sm:$0xff] %v777
          %v779 = vld [vmem:[%s743 + $0x110] sm:$0xff]
          %780 = vst [vmem:[%s744 + $0x110] sm:$0xff] %v779
          %v781 = vld [vmem:[%s743 + $0x120] sm:$0xff]
          %782 = vst [vmem:[%s744 + $0x120] sm:$0xff] %v781
          %v783 = vld [vmem:[%s743 + $0x130] sm:$0xff]
          %784 = vst [vmem:[%s744 + $0x130] sm:$0xff] %v783
          %v785 = vld [vmem:[%s743 + $0x140] sm:$0xff]
          %786 = vst [vmem:[%s744 + $0x140] sm:$0xff] %v785
          %v787 = vld [vmem:[%s743 + $0x150] sm:$0xff]
          %788 = vst [vmem:[%s744 + $0x150] sm:$0xff] %v787
          %v789 = vld [vmem:[%s743 + $0x160] sm:$0xff]
          %790 = vst [vmem:[%s744 + $0x160] sm:$0xff] %v789
          %v791 = vld [vmem:[%s743 + $0x170] sm:$0xff]
          %792 = vst [vmem:[%s744 + $0x170] sm:$0xff] %v791
          %v793 = vld [vmem:[%s743 + $0x180] sm:$0xff]
          %794 = vst [vmem:[%s744 + $0x180] sm:$0xff] %v793
          %v795 = vld [vmem:[%s743 + $0x190] sm:$0xff]
          %796 = vst [vmem:[%s744 + $0x190] sm:$0xff] %v795
          %v797 = vld [vmem:[%s743 + $0x1a0] sm:$0xff]
          %798 = vst [vmem:[%s744 + $0x1a0] sm:$0xff] %v797
          %v799 = vld [vmem:[%s743 + $0x1b0] sm:$0xff]
          %800 = vst [vmem:[%s744 + $0x1b0] sm:$0xff] %v799
          %v801 = vld [vmem:[%s743 + $0x1c0] sm:$0xff]
          %802 = vst [vmem:[%s744 + $0x1c0] sm:$0xff] %v801
          %v803 = vld [vmem:[%s743 + $0x1d0] sm:$0xff]
          %804 = vst [vmem:[%s744 + $0x1d0] sm:$0xff] %v803
          %v805 = vld [vmem:[%s743 + $0x1e0] sm:$0xff]
          %806 = vst [vmem:[%s744 + $0x1e0] sm:$0xff] %v805
          %v807 = vld [vmem:[%s743 + $0x1f0] sm:$0xff]
          %808 = vst [vmem:[%s744 + $0x1f0] sm:$0xff] %v807
          %v809 = vld [vmem:[%s743 + $0x200] sm:$0xff]
          %810 = vst [vmem:[%s744 + $0x200] sm:$0xff] %v809
          %v811 = vld [vmem:[%s743 + $0x210] sm:$0xff]
          %812 = vst [vmem:[%s744 + $0x210] sm:$0xff] %v811
          %v813 = vld [vmem:[%s743 + $0x220] sm:$0xff]
          %814 = vst [vmem:[%s744 + $0x220] sm:$0xff] %v813
          %v815 = vld [vmem:[%s743 + $0x230] sm:$0xff]
          %816 = vst [vmem:[%s744 + $0x230] sm:$0xff] %v815
          %v817 = vld [vmem:[%s743 + $0x240] sm:$0xff]
          %818 = vst [vmem:[%s744 + $0x240] sm:$0xff] %v817
          %v819 = vld [vmem:[%s743 + $0x250] sm:$0xff]
          %820 = vst [vmem:[%s744 + $0x250] sm:$0xff] %v819
          %v821 = vld [vmem:[%s743 + $0x260] sm:$0xff]
          %822 = vst [vmem:[%s744 + $0x260] sm:$0xff] %v821
          %v823 = vld [vmem:[%s743 + $0x270] sm:$0xff]
          %824 = vst [vmem:[%s744 + $0x270] sm:$0xff] %v823
          %v825 = vld [vmem:[%s743 + $0x280] sm:$0xff]
          %826 = vst [vmem:[%s744 + $0x280] sm:$0xff] %v825
          %v827 = vld [vmem:[%s743 + $0x290] sm:$0xff]
          %828 = vst [vmem:[%s744 + $0x290] sm:$0xff] %v827
          %v829 = vld [vmem:[%s743 + $0x2a0] sm:$0xff]
          %830 = vst [vmem:[%s744 + $0x2a0] sm:$0xff] %v829
          %v831 = vld [vmem:[%s743 + $0x2b0] sm:$0xff]
          %832 = vst [vmem:[%s744 + $0x2b0] sm:$0xff] %v831
          %v833 = vld [vmem:[%s743 + $0x2c0] sm:$0xff]
          %834 = vst [vmem:[%s744 + $0x2c0] sm:$0xff] %v833
          %v835 = vld [vmem:[%s743 + $0x2d0] sm:$0xff]
          %836 = vst [vmem:[%s744 + $0x2d0] sm:$0xff] %v835
          %v837 = vld [vmem:[%s743 + $0x2e0] sm:$0xff]
          %838 = vst [vmem:[%s744 + $0x2e0] sm:$0xff] %v837
          %v839 = vld [vmem:[%s743 + $0x2f0] sm:$0xff]
          %840 = vst [vmem:[%s744 + $0x2f0] sm:$0xff] %v839
          %v841 = vld [vmem:[%s743 + $0x300] sm:$0xff]
          %842 = vst [vmem:[%s744 + $0x300] sm:$0xff] %v841
          %v843 = vld [vmem:[%s743 + $0x310] sm:$0xff]
          %844 = vst [vmem:[%s744 + $0x310] sm:$0xff] %v843
          %v845 = vld [vmem:[%s743 + $0x320] sm:$0xff]
          %846 = vst [vmem:[%s744 + $0x320] sm:$0xff] %v845
          %v847 = vld [vmem:[%s743 + $0x330] sm:$0xff]
          %848 = vst [vmem:[%s744 + $0x330] sm:$0xff] %v847
          %v849 = vld [vmem:[%s743 + $0x340] sm:$0xff]
          %850 = vst [vmem:[%s744 + $0x340] sm:$0xff] %v849
          %v851 = vld [vmem:[%s743 + $0x350] sm:$0xff]
          %852 = vst [vmem:[%s744 + $0x350] sm:$0xff] %v851
          %v853 = vld [vmem:[%s743 + $0x360] sm:$0xff]
          %854 = vst [vmem:[%s744 + $0x360] sm:$0xff] %v853
          %v855 = vld [vmem:[%s743 + $0x370] sm:$0xff]
          %856 = vst [vmem:[%s744 + $0x370] sm:$0xff] %v855
          %v857 = vld [vmem:[%s743 + $0x380] sm:$0xff]
          %858 = vst [vmem:[%s744 + $0x380] sm:$0xff] %v857
          %v859 = vld [vmem:[%s743 + $0x390] sm:$0xff]
          %860 = vst [vmem:[%s744 + $0x390] sm:$0xff] %v859
          %v861 = vld [vmem:[%s743 + $0x3a0] sm:$0xff]
          %862 = vst [vmem:[%s744 + $0x3a0] sm:$0xff] %v861
          %v863 = vld [vmem:[%s743 + $0x3b0] sm:$0xff]
          %864 = vst [vmem:[%s744 + $0x3b0] sm:$0xff] %v863
          %v865 = vld [vmem:[%s743 + $0x3c0] sm:$0xff]
          %866 = vst [vmem:[%s744 + $0x3c0] sm:$0xff] %v865
          %v867 = vld [vmem:[%s743 + $0x3d0] sm:$0xff]
          %868 = vst [vmem:[%s744 + $0x3d0] sm:$0xff] %v867
          %v869 = vld [vmem:[%s743 + $0x3e0] sm:$0xff]
          %870 = vst [vmem:[%s744 + $0x3e0] sm:$0xff] %v869
          %v871 = vld [vmem:[%s743 + $0x3f0] sm:$0xff]
          %872 = vst [vmem:[%s744 + $0x3f0] sm:$0xff] %v871
          %v873 = vld [vmem:[%s743 + $0x400] sm:$0xff]
          %874 = vst [vmem:[%s744 + $0x400] sm:$0xff] %v873
          %v875 = vld [vmem:[%s743 + $0x410] sm:$0xff]
          %876 = vst [vmem:[%s744 + $0x410] sm:$0xff] %v875
          %v877 = vld [vmem:[%s743 + $0x420] sm:$0xff]
          %878 = vst [vmem:[%s744 + $0x420] sm:$0xff] %v877
          %v879 = vld [vmem:[%s743 + $0x430] sm:$0xff]
          %880 = vst [vmem:[%s744 + $0x430] sm:$0xff] %v879
          %v881 = vld [vmem:[%s743 + $0x440] sm:$0xff]
          %882 = vst [vmem:[%s744 + $0x440] sm:$0xff] %v881
          %v883 = vld [vmem:[%s743 + $0x450] sm:$0xff]
          %884 = vst [vmem:[%s744 + $0x450] sm:$0xff] %v883
          %v885 = vld [vmem:[%s743 + $0x460] sm:$0xff]
          %886 = vst [vmem:[%s744 + $0x460] sm:$0xff] %v885
          %v887 = vld [vmem:[%s743 + $0x470] sm:$0xff]
          %888 = vst [vmem:[%s744 + $0x470] sm:$0xff] %v887
          %v889 = vld [vmem:[%s743 + $0x480] sm:$0xff]
          %890 = vst [vmem:[%s744 + $0x480] sm:$0xff] %v889
          %v891 = vld [vmem:[%s743 + $0x490] sm:$0xff]
          %892 = vst [vmem:[%s744 + $0x490] sm:$0xff] %v891
          %v893 = vld [vmem:[%s743 + $0x4a0] sm:$0xff]
          %894 = vst [vmem:[%s744 + $0x4a0] sm:$0xff] %v893
          %v895 = vld [vmem:[%s743 + $0x4b0] sm:$0xff]
          %896 = vst [vmem:[%s744 + $0x4b0] sm:$0xff] %v895
          %v897 = vld [vmem:[%s743 + $0x4c0] sm:$0xff]
          %898 = vst [vmem:[%s744 + $0x4c0] sm:$0xff] %v897
          %v899 = vld [vmem:[%s743 + $0x4d0] sm:$0xff]
          %900 = vst [vmem:[%s744 + $0x4d0] sm:$0xff] %v899
          %v901 = vld [vmem:[%s743 + $0x4e0] sm:$0xff]
          %902 = vst [vmem:[%s744 + $0x4e0] sm:$0xff] %v901
          %v903 = vld [vmem:[%s743 + $0x4f0] sm:$0xff]
          %904 = vst [vmem:[%s744 + $0x4f0] sm:$0xff] %v903
          %v905 = vld [vmem:[%s743 + $0x500] sm:$0xff]
          %906 = vst [vmem:[%s744 + $0x500] sm:$0xff] %v905
          %v907 = vld [vmem:[%s743 + $0x510] sm:$0xff]
          %908 = vst [vmem:[%s744 + $0x510] sm:$0xff] %v907
          %v909 = vld [vmem:[%s743 + $0x520] sm:$0xff]
          %910 = vst [vmem:[%s744 + $0x520] sm:$0xff] %v909
          %v911 = vld [vmem:[%s743 + $0x530] sm:$0xff]
          %912 = vst [vmem:[%s744 + $0x530] sm:$0xff] %v911
          %v913 = vld [vmem:[%s743 + $0x540] sm:$0xff]
          %914 = vst [vmem:[%s744 + $0x540] sm:$0xff] %v913
          %v915 = vld [vmem:[%s743 + $0x550] sm:$0xff]
          %916 = vst [vmem:[%s744 + $0x550] sm:$0xff] %v915
          %v917 = vld [vmem:[%s743 + $0x560] sm:$0xff]
          %918 = vst [vmem:[%s744 + $0x560] sm:$0xff] %v917
          %v919 = vld [vmem:[%s743 + $0x570] sm:$0xff]
          %920 = vst [vmem:[%s744 + $0x570] sm:$0xff] %v919
          %v921 = vld [vmem:[%s743 + $0x580] sm:$0xff]
          %922 = vst [vmem:[%s744 + $0x580] sm:$0xff] %v921
          %v923 = vld [vmem:[%s743 + $0x590] sm:$0xff]
          %924 = vst [vmem:[%s744 + $0x590] sm:$0xff] %v923
          %v925 = vld [vmem:[%s743 + $0x5a0] sm:$0xff]
          %926 = vst [vmem:[%s744 + $0x5a0] sm:$0xff] %v925
          %v927 = vld [vmem:[%s743 + $0x5b0] sm:$0xff]
          %928 = vst [vmem:[%s744 + $0x5b0] sm:$0xff] %v927
          %v929 = vld [vmem:[%s743 + $0x5c0] sm:$0xff]
          %930 = vst [vmem:[%s744 + $0x5c0] sm:$0xff] %v929
          %v931 = vld [vmem:[%s743 + $0x5d0] sm:$0xff]
          %932 = vst [vmem:[%s744 + $0x5d0] sm:$0xff] %v931
          %v933 = vld [vmem:[%s743 + $0x5e0] sm:$0xff]
          %934 = vst [vmem:[%s744 + $0x5e0] sm:$0xff] %v933
          %v935 = vld [vmem:[%s743 + $0x5f0] sm:$0xff]
          %936 = vst [vmem:[%s744 + $0x5f0] sm:$0xff] %v935
          %v937 = vld [vmem:[%s743 + $0x600] sm:$0xff]
          %938 = vst [vmem:[%s744 + $0x600] sm:$0xff] %v937
          %v939 = vld [vmem:[%s743 + $0x610] sm:$0xff]
          %940 = vst [vmem:[%s744 + $0x610] sm:$0xff] %v939
          %v941 = vld [vmem:[%s743 + $0x620] sm:$0xff]
          %942 = vst [vmem:[%s744 + $0x620] sm:$0xff] %v941
          %v943 = vld [vmem:[%s743 + $0x630] sm:$0xff]
          %944 = vst [vmem:[%s744 + $0x630] sm:$0xff] %v943
          %v945 = vld [vmem:[%s743 + $0x640] sm:$0xff]
          %946 = vst [vmem:[%s744 + $0x640] sm:$0xff] %v945
          %v947 = vld [vmem:[%s743 + $0x650] sm:$0xff]
          %948 = vst [vmem:[%s744 + $0x650] sm:$0xff] %v947
          %v949 = vld [vmem:[%s743 + $0x660] sm:$0xff]
          %950 = vst [vmem:[%s744 + $0x660] sm:$0xff] %v949
          %v951 = vld [vmem:[%s743 + $0x670] sm:$0xff]
          %952 = vst [vmem:[%s744 + $0x670] sm:$0xff] %v951
          %v953 = vld [vmem:[%s743 + $0x680] sm:$0xff]
          %954 = vst [vmem:[%s744 + $0x680] sm:$0xff] %v953
          %v955 = vld [vmem:[%s743 + $0x690] sm:$0xff]
          %956 = vst [vmem:[%s744 + $0x690] sm:$0xff] %v955
          %v957 = vld [vmem:[%s743 + $0x6a0] sm:$0xff]
          %958 = vst [vmem:[%s744 + $0x6a0] sm:$0xff] %v957
          %v959 = vld [vmem:[%s743 + $0x6b0] sm:$0xff]
          %960 = vst [vmem:[%s744 + $0x6b0] sm:$0xff] %v959
          %v961 = vld [vmem:[%s743 + $0x6c0] sm:$0xff]
          %962 = vst [vmem:[%s744 + $0x6c0] sm:$0xff] %v961
          %v963 = vld [vmem:[%s743 + $0x6d0] sm:$0xff]
          %964 = vst [vmem:[%s744 + $0x6d0] sm:$0xff] %v963
          %v965 = vld [vmem:[%s743 + $0x6e0] sm:$0xff]
          %966 = vst [vmem:[%s744 + $0x6e0] sm:$0xff] %v965
          %v967 = vld [vmem:[%s743 + $0x6f0] sm:$0xff]
          %968 = vst [vmem:[%s744 + $0x6f0] sm:$0xff] %v967
          %v969 = vld [vmem:[%s743 + $0x700] sm:$0xff]
          %970 = vst [vmem:[%s744 + $0x700] sm:$0xff] %v969
          %v971 = vld [vmem:[%s743 + $0x710] sm:$0xff]
          %972 = vst [vmem:[%s744 + $0x710] sm:$0xff] %v971
          %v973 = vld [vmem:[%s743 + $0x720] sm:$0xff]
          %974 = vst [vmem:[%s744 + $0x720] sm:$0xff] %v973
          %v975 = vld [vmem:[%s743 + $0x730] sm:$0xff]
          %976 = vst [vmem:[%s744 + $0x730] sm:$0xff] %v975
          %v977 = vld [vmem:[%s743 + $0x740] sm:$0xff]
          %978 = vst [vmem:[%s744 + $0x740] sm:$0xff] %v977
          %v979 = vld [vmem:[%s743 + $0x750] sm:$0xff]
          %980 = vst [vmem:[%s744 + $0x750] sm:$0xff] %v979
          %v981 = vld [vmem:[%s743 + $0x760] sm:$0xff]
          %982 = vst [vmem:[%s744 + $0x760] sm:$0xff] %v981
          %v983 = vld [vmem:[%s743 + $0x770] sm:$0xff]
          %984 = vst [vmem:[%s744 + $0x770] sm:$0xff] %v983
          %v985 = vld [vmem:[%s743 + $0x780] sm:$0xff]
          %986 = vst [vmem:[%s744 + $0x780] sm:$0xff] %v985
          %v987 = vld [vmem:[%s743 + $0x790] sm:$0xff]
          %988 = vst [vmem:[%s744 + $0x790] sm:$0xff] %v987
          %v989 = vld [vmem:[%s743 + $0x7a0] sm:$0xff]
          %990 = vst [vmem:[%s744 + $0x7a0] sm:$0xff] %v989
          %v991 = vld [vmem:[%s743 + $0x7b0] sm:$0xff]
          %992 = vst [vmem:[%s744 + $0x7b0] sm:$0xff] %v991
          %v993 = vld [vmem:[%s743 + $0x7c0] sm:$0xff]
          %994 = vst [vmem:[%s744 + $0x7c0] sm:$0xff] %v993
          %v995 = vld [vmem:[%s743 + $0x7d0] sm:$0xff]
          %996 = vst [vmem:[%s744 + $0x7d0] sm:$0xff] %v995
          %v997 = vld [vmem:[%s743 + $0x7e0] sm:$0xff]
          %998 = vst [vmem:[%s744 + $0x7e0] sm:$0xff] %v997
          %v999 = vld [vmem:[%s743 + $0x7f0] sm:$0xff]
          %1000 = vst [vmem:[%s744 + $0x7f0] sm:$0xff] %v999
          %v1001 = vld [vmem:[%s743 + $0x800] sm:$0xff]
          %1002 = vst [vmem:[%s744 + $0x800] sm:$0xff] %v1001
          %v1003 = vld [vmem:[%s743 + $0x810] sm:$0xff]
          %1004 = vst [vmem:[%s744 + $0x810] sm:$0xff] %v1003
          %v1005 = vld [vmem:[%s743 + $0x820] sm:$0xff]
          %1006 = vst [vmem:[%s744 + $0x820] sm:$0xff] %v1005
          %v1007 = vld [vmem:[%s743 + $0x830] sm:$0xff]
          %1008 = vst [vmem:[%s744 + $0x830] sm:$0xff] %v1007
          %v1009 = vld [vmem:[%s743 + $0x840] sm:$0xff]
          %1010 = vst [vmem:[%s744 + $0x840] sm:$0xff] %v1009
          %v1011 = vld [vmem:[%s743 + $0x850] sm:$0xff]
          %1012 = vst [vmem:[%s744 + $0x850] sm:$0xff] %v1011
          %v1013 = vld [vmem:[%s743 + $0x860] sm:$0xff]
          %1014 = vst [vmem:[%s744 + $0x860] sm:$0xff] %v1013
          %v1015 = vld [vmem:[%s743 + $0x870] sm:$0xff]
          %1016 = vst [vmem:[%s744 + $0x870] sm:$0xff] %v1015
          %v1017 = vld [vmem:[%s743 + $0x880] sm:$0xff]
          %1018 = vst [vmem:[%s744 + $0x880] sm:$0xff] %v1017
          %v1019 = vld [vmem:[%s743 + $0x890] sm:$0xff]
          %1020 = vst [vmem:[%s744 + $0x890] sm:$0xff] %v1019
          %v1021 = vld [vmem:[%s743 + $0x8a0] sm:$0xff]
          %1022 = vst [vmem:[%s744 + $0x8a0] sm:$0xff] %v1021
          %v1023 = vld [vmem:[%s743 + $0x8b0] sm:$0xff]
          %1024 = vst [vmem:[%s744 + $0x8b0] sm:$0xff] %v1023
          %v1025 = vld [vmem:[%s743 + $0x8c0] sm:$0xff]
          %1026 = vst [vmem:[%s744 + $0x8c0] sm:$0xff] %v1025
          %v1027 = vld [vmem:[%s743 + $0x8d0] sm:$0xff]
          %1028 = vst [vmem:[%s744 + $0x8d0] sm:$0xff] %v1027
          %v1029 = vld [vmem:[%s743 + $0x8e0] sm:$0xff]
          %1030 = vst [vmem:[%s744 + $0x8e0] sm:$0xff] %v1029
          %v1031 = vld [vmem:[%s743 + $0x8f0] sm:$0xff]
          %1032 = vst [vmem:[%s744 + $0x8f0] sm:$0xff] %v1031
          %v1033 = vld [vmem:[%s743 + $0x900] sm:$0xff]
          %1034 = vst [vmem:[%s744 + $0x900] sm:$0xff] %v1033
          %v1035 = vld [vmem:[%s743 + $0x910] sm:$0xff]
          %1036 = vst [vmem:[%s744 + $0x910] sm:$0xff] %v1035
          %v1037 = vld [vmem:[%s743 + $0x920] sm:$0xff]
          %1038 = vst [vmem:[%s744 + $0x920] sm:$0xff] %v1037
          %v1039 = vld [vmem:[%s743 + $0x930] sm:$0xff]
          %1040 = vst [vmem:[%s744 + $0x930] sm:$0xff] %v1039
          %v1041 = vld [vmem:[%s743 + $0x940] sm:$0xff]
          %1042 = vst [vmem:[%s744 + $0x940] sm:$0xff] %v1041
          %v1043 = vld [vmem:[%s743 + $0x950] sm:$0xff]
          %1044 = vst [vmem:[%s744 + $0x950] sm:$0xff] %v1043
          %v1045 = vld [vmem:[%s743 + $0x960] sm:$0xff]
          %1046 = vst [vmem:[%s744 + $0x960] sm:$0xff] %v1045
          %v1047 = vld [vmem:[%s743 + $0x970] sm:$0xff]
          %1048 = vst [vmem:[%s744 + $0x970] sm:$0xff] %v1047
          %v1049 = vld [vmem:[%s743 + $0x980] sm:$0xff]
          %1050 = vst [vmem:[%s744 + $0x980] sm:$0xff] %v1049
          %v1051 = vld [vmem:[%s743 + $0x990] sm:$0xff]
          %1052 = vst [vmem:[%s744 + $0x990] sm:$0xff] %v1051
          %v1053 = vld [vmem:[%s743 + $0x9a0] sm:$0xff]
          %1054 = vst [vmem:[%s744 + $0x9a0] sm:$0xff] %v1053
          %v1055 = vld [vmem:[%s743 + $0x9b0] sm:$0xff]
          %1056 = vst [vmem:[%s744 + $0x9b0] sm:$0xff] %v1055
          %v1057 = vld [vmem:[%s743 + $0x9c0] sm:$0xff]
          %1058 = vst [vmem:[%s744 + $0x9c0] sm:$0xff] %v1057
          %v1059 = vld [vmem:[%s743 + $0x9d0] sm:$0xff]
          %1060 = vst [vmem:[%s744 + $0x9d0] sm:$0xff] %v1059
          %v1061 = vld [vmem:[%s743 + $0x9e0] sm:$0xff]
          %1062 = vst [vmem:[%s744 + $0x9e0] sm:$0xff] %v1061
          %v1063 = vld [vmem:[%s743 + $0x9f0] sm:$0xff]
          %1064 = vst [vmem:[%s744 + $0x9f0] sm:$0xff] %v1063
          %v1065 = vld [vmem:[%s743 + $0xa00] sm:$0xff]
          %1066 = vst [vmem:[%s744 + $0xa00] sm:$0xff] %v1065
          %v1067 = vld [vmem:[%s743 + $0xa10] sm:$0xff]
          %1068 = vst [vmem:[%s744 + $0xa10] sm:$0xff] %v1067
          %v1069 = vld [vmem:[%s743 + $0xa20] sm:$0xff]
          %1070 = vst [vmem:[%s744 + $0xa20] sm:$0xff] %v1069
          %v1071 = vld [vmem:[%s743 + $0xa30] sm:$0xff]
          %1072 = vst [vmem:[%s744 + $0xa30] sm:$0xff] %v1071
          %v1073 = vld [vmem:[%s743 + $0xa40] sm:$0xff]
          %1074 = vst [vmem:[%s744 + $0xa40] sm:$0xff] %v1073
          %v1075 = vld [vmem:[%s743 + $0xa50] sm:$0xff]
          %1076 = vst [vmem:[%s744 + $0xa50] sm:$0xff] %v1075
          %v1077 = vld [vmem:[%s743 + $0xa60] sm:$0xff]
          %1078 = vst [vmem:[%s744 + $0xa60] sm:$0xff] %v1077
          %v1079 = vld [vmem:[%s743 + $0xa70] sm:$0xff]
          %1080 = vst [vmem:[%s744 + $0xa70] sm:$0xff] %v1079
          %v1081 = vld [vmem:[%s743 + $0xa80] sm:$0xff]
          %1082 = vst [vmem:[%s744 + $0xa80] sm:$0xff] %v1081
          %v1083 = vld [vmem:[%s743 + $0xa90] sm:$0xff]
          %1084 = vst [vmem:[%s744 + $0xa90] sm:$0xff] %v1083
          %v1085 = vld [vmem:[%s743 + $0xaa0] sm:$0xff]
          %1086 = vst [vmem:[%s744 + $0xaa0] sm:$0xff] %v1085
          %v1087 = vld [vmem:[%s743 + $0xab0] sm:$0xff]
          %1088 = vst [vmem:[%s744 + $0xab0] sm:$0xff] %v1087
          %v1089 = vld [vmem:[%s743 + $0xac0] sm:$0xff]
          %1090 = vst [vmem:[%s744 + $0xac0] sm:$0xff] %v1089
          %v1091 = vld [vmem:[%s743 + $0xad0] sm:$0xff]
          %1092 = vst [vmem:[%s744 + $0xad0] sm:$0xff] %v1091
          %v1093 = vld [vmem:[%s743 + $0xae0] sm:$0xff]
          %1094 = vst [vmem:[%s744 + $0xae0] sm:$0xff] %v1093
          %v1095 = vld [vmem:[%s743 + $0xaf0] sm:$0xff]
          %1096 = vst [vmem:[%s744 + $0xaf0] sm:$0xff] %v1095
          %v1097 = vld [vmem:[%s743 + $0xb00] sm:$0xff]
          %1098 = vst [vmem:[%s744 + $0xb00] sm:$0xff] %v1097
          %v1099 = vld [vmem:[%s743 + $0xb10] sm:$0xff]
          %1100 = vst [vmem:[%s744 + $0xb10] sm:$0xff] %v1099
          %v1101 = vld [vmem:[%s743 + $0xb20] sm:$0xff]
          %1102 = vst [vmem:[%s744 + $0xb20] sm:$0xff] %v1101
          %v1103 = vld [vmem:[%s743 + $0xb30] sm:$0xff]
          %1104 = vst [vmem:[%s744 + $0xb30] sm:$0xff] %v1103
          %v1105 = vld [vmem:[%s743 + $0xb40] sm:$0xff]
          %1106 = vst [vmem:[%s744 + $0xb40] sm:$0xff] %v1105
          %v1107 = vld [vmem:[%s743 + $0xb50] sm:$0xff]
          %1108 = vst [vmem:[%s744 + $0xb50] sm:$0xff] %v1107
          %v1109 = vld [vmem:[%s743 + $0xb60] sm:$0xff]
          %1110 = vst [vmem:[%s744 + $0xb60] sm:$0xff] %v1109
          %v1111 = vld [vmem:[%s743 + $0xb70] sm:$0xff]
          %1112 = vst [vmem:[%s744 + $0xb70] sm:$0xff] %v1111
          %v1113 = vld [vmem:[%s743 + $0xb80] sm:$0xff]
          %1114 = vst [vmem:[%s744 + $0xb80] sm:$0xff] %v1113
          %v1115 = vld [vmem:[%s743 + $0xb90] sm:$0xff]
          %1116 = vst [vmem:[%s744 + $0xb90] sm:$0xff] %v1115
          %v1117 = vld [vmem:[%s743 + $0xba0] sm:$0xff]
          %1118 = vst [vmem:[%s744 + $0xba0] sm:$0xff] %v1117
          %v1119 = vld [vmem:[%s743 + $0xbb0] sm:$0xff]
          %1120 = vst [vmem:[%s744 + $0xbb0] sm:$0xff] %v1119
          %v1121 = vld [vmem:[%s743 + $0xbc0] sm:$0xff]
          %1122 = vst [vmem:[%s744 + $0xbc0] sm:$0xff] %v1121
          %v1123 = vld [vmem:[%s743 + $0xbd0] sm:$0xff]
          %1124 = vst [vmem:[%s744 + $0xbd0] sm:$0xff] %v1123
          %v1125 = vld [vmem:[%s743 + $0xbe0] sm:$0xff]
          %1126 = vst [vmem:[%s744 + $0xbe0] sm:$0xff] %v1125
          %v1127 = vld [vmem:[%s743 + $0xbf0] sm:$0xff]
          %1128 = vst [vmem:[%s744 + $0xbf0] sm:$0xff] %v1127
          %v1129 = vld [vmem:[%s743 + $0xc00] sm:$0xff]
          %1130 = vst [vmem:[%s744 + $0xc00] sm:$0xff] %v1129
          %v1131 = vld [vmem:[%s743 + $0xc10] sm:$0xff]
          %1132 = vst [vmem:[%s744 + $0xc10] sm:$0xff] %v1131
          %v1133 = vld [vmem:[%s743 + $0xc20] sm:$0xff]
          %1134 = vst [vmem:[%s744 + $0xc20] sm:$0xff] %v1133
          %v1135 = vld [vmem:[%s743 + $0xc30] sm:$0xff]
          %1136 = vst [vmem:[%s744 + $0xc30] sm:$0xff] %v1135
          %v1137 = vld [vmem:[%s743 + $0xc40] sm:$0xff]
          %1138 = vst [vmem:[%s744 + $0xc40] sm:$0xff] %v1137
          %v1139 = vld [vmem:[%s743 + $0xc50] sm:$0xff]
          %1140 = vst [vmem:[%s744 + $0xc50] sm:$0xff] %v1139
          %v1141 = vld [vmem:[%s743 + $0xc60] sm:$0xff]
          %1142 = vst [vmem:[%s744 + $0xc60] sm:$0xff] %v1141
          %v1143 = vld [vmem:[%s743 + $0xc70] sm:$0xff]
          %1144 = vst [vmem:[%s744 + $0xc70] sm:$0xff] %v1143
          %v1145 = vld [vmem:[%s743 + $0xc80] sm:$0xff]
          %1146 = vst [vmem:[%s744 + $0xc80] sm:$0xff] %v1145
          %v1147 = vld [vmem:[%s743 + $0xc90] sm:$0xff]
          %1148 = vst [vmem:[%s744 + $0xc90] sm:$0xff] %v1147
          %v1149 = vld [vmem:[%s743 + $0xca0] sm:$0xff]
          %1150 = vst [vmem:[%s744 + $0xca0] sm:$0xff] %v1149
          %v1151 = vld [vmem:[%s743 + $0xcb0] sm:$0xff]
          %1152 = vst [vmem:[%s744 + $0xcb0] sm:$0xff] %v1151
          %v1153 = vld [vmem:[%s743 + $0xcc0] sm:$0xff]
          %1154 = vst [vmem:[%s744 + $0xcc0] sm:$0xff] %v1153
          %v1155 = vld [vmem:[%s743 + $0xcd0] sm:$0xff]
          %1156 = vst [vmem:[%s744 + $0xcd0] sm:$0xff] %v1155
          %v1157 = vld [vmem:[%s743 + $0xce0] sm:$0xff]
          %1158 = vst [vmem:[%s744 + $0xce0] sm:$0xff] %v1157
          %v1159 = vld [vmem:[%s743 + $0xcf0] sm:$0xff]
          %1160 = vst [vmem:[%s744 + $0xcf0] sm:$0xff] %v1159
          %v1161 = vld [vmem:[%s743 + $0xd00] sm:$0xff]
          %1162 = vst [vmem:[%s744 + $0xd00] sm:$0xff] %v1161
          %v1163 = vld [vmem:[%s743 + $0xd10] sm:$0xff]
          %1164 = vst [vmem:[%s744 + $0xd10] sm:$0xff] %v1163
          %v1165 = vld [vmem:[%s743 + $0xd20] sm:$0xff]
          %1166 = vst [vmem:[%s744 + $0xd20] sm:$0xff] %v1165
          %v1167 = vld [vmem:[%s743 + $0xd30] sm:$0xff]
          %1168 = vst [vmem:[%s744 + $0xd30] sm:$0xff] %v1167
          %v1169 = vld [vmem:[%s743 + $0xd40] sm:$0xff]
          %1170 = vst [vmem:[%s744 + $0xd40] sm:$0xff] %v1169
          %v1171 = vld [vmem:[%s743 + $0xd50] sm:$0xff]
          %1172 = vst [vmem:[%s744 + $0xd50] sm:$0xff] %v1171
          %v1173 = vld [vmem:[%s743 + $0xd60] sm:$0xff]
          %1174 = vst [vmem:[%s744 + $0xd60] sm:$0xff] %v1173
          %v1175 = vld [vmem:[%s743 + $0xd70] sm:$0xff]
          %1176 = vst [vmem:[%s744 + $0xd70] sm:$0xff] %v1175
          %v1177 = vld [vmem:[%s743 + $0xd80] sm:$0xff]
          %1178 = vst [vmem:[%s744 + $0xd80] sm:$0xff] %v1177
          %v1179 = vld [vmem:[%s743 + $0xd90] sm:$0xff]
          %1180 = vst [vmem:[%s744 + $0xd90] sm:$0xff] %v1179
          %v1181 = vld [vmem:[%s743 + $0xda0] sm:$0xff]
          %1182 = vst [vmem:[%s744 + $0xda0] sm:$0xff] %v1181
          %v1183 = vld [vmem:[%s743 + $0xdb0] sm:$0xff]
          %1184 = vst [vmem:[%s744 + $0xdb0] sm:$0xff] %v1183
          %v1185 = vld [vmem:[%s743 + $0xdc0] sm:$0xff]
          %1186 = vst [vmem:[%s744 + $0xdc0] sm:$0xff] %v1185
          %v1187 = vld [vmem:[%s743 + $0xdd0] sm:$0xff]
          %1188 = vst [vmem:[%s744 + $0xdd0] sm:$0xff] %v1187
          %v1189 = vld [vmem:[%s743 + $0xde0] sm:$0xff]
          %1190 = vst [vmem:[%s744 + $0xde0] sm:$0xff] %v1189
          %v1191 = vld [vmem:[%s743 + $0xdf0] sm:$0xff]
          %1192 = vst [vmem:[%s744 + $0xdf0] sm:$0xff] %v1191
          %v1193 = vld [vmem:[%s743 + $0xe00] sm:$0xff]
          %1194 = vst [vmem:[%s744 + $0xe00] sm:$0xff] %v1193
          %v1195 = vld [vmem:[%s743 + $0xe10] sm:$0xff]
          %1196 = vst [vmem:[%s744 + $0xe10] sm:$0xff] %v1195
          %v1197 = vld [vmem:[%s743 + $0xe20] sm:$0xff]
          %1198 = vst [vmem:[%s744 + $0xe20] sm:$0xff] %v1197
          %v1199 = vld [vmem:[%s743 + $0xe30] sm:$0xff]
          %1200 = vst [vmem:[%s744 + $0xe30] sm:$0xff] %v1199
          %v1201 = vld [vmem:[%s743 + $0xe40] sm:$0xff]
          %1202 = vst [vmem:[%s744 + $0xe40] sm:$0xff] %v1201
          %v1203 = vld [vmem:[%s743 + $0xe50] sm:$0xff]
          %1204 = vst [vmem:[%s744 + $0xe50] sm:$0xff] %v1203
          %v1205 = vld [vmem:[%s743 + $0xe60] sm:$0xff]
          %1206 = vst [vmem:[%s744 + $0xe60] sm:$0xff] %v1205
          %v1207 = vld [vmem:[%s743 + $0xe70] sm:$0xff]
          %1208 = vst [vmem:[%s744 + $0xe70] sm:$0xff] %v1207
          %v1209 = vld [vmem:[%s743 + $0xe80] sm:$0xff]
          %1210 = vst [vmem:[%s744 + $0xe80] sm:$0xff] %v1209
          %v1211 = vld [vmem:[%s743 + $0xe90] sm:$0xff]
          %1212 = vst [vmem:[%s744 + $0xe90] sm:$0xff] %v1211
          %v1213 = vld [vmem:[%s743 + $0xea0] sm:$0xff]
          %1214 = vst [vmem:[%s744 + $0xea0] sm:$0xff] %v1213
          %v1215 = vld [vmem:[%s743 + $0xeb0] sm:$0xff]
          %1216 = vst [vmem:[%s744 + $0xeb0] sm:$0xff] %v1215
          %v1217 = vld [vmem:[%s743 + $0xec0] sm:$0xff]
          %1218 = vst [vmem:[%s744 + $0xec0] sm:$0xff] %v1217
          %v1219 = vld [vmem:[%s743 + $0xed0] sm:$0xff]
          %1220 = vst [vmem:[%s744 + $0xed0] sm:$0xff] %v1219
          %v1221 = vld [vmem:[%s743 + $0xee0] sm:$0xff]
          %1222 = vst [vmem:[%s744 + $0xee0] sm:$0xff] %v1221
          %v1223 = vld [vmem:[%s743 + $0xef0] sm:$0xff]
          %1224 = vst [vmem:[%s744 + $0xef0] sm:$0xff] %v1223
          %v1225 = vld [vmem:[%s743 + $0xf00] sm:$0xff]
          %1226 = vst [vmem:[%s744 + $0xf00] sm:$0xff] %v1225
          %v1227 = vld [vmem:[%s743 + $0xf10] sm:$0xff]
          %1228 = vst [vmem:[%s744 + $0xf10] sm:$0xff] %v1227
          %v1229 = vld [vmem:[%s743 + $0xf20] sm:$0xff]
          %1230 = vst [vmem:[%s744 + $0xf20] sm:$0xff] %v1229
          %v1231 = vld [vmem:[%s743 + $0xf30] sm:$0xff]
          %1232 = vst [vmem:[%s744 + $0xf30] sm:$0xff] %v1231
          %v1233 = vld [vmem:[%s743 + $0xf40] sm:$0xff]
          %1234 = vst [vmem:[%s744 + $0xf40] sm:$0xff] %v1233
          %v1235 = vld [vmem:[%s743 + $0xf50] sm:$0xff]
          %1236 = vst [vmem:[%s744 + $0xf50] sm:$0xff] %v1235
          %v1237 = vld [vmem:[%s743 + $0xf60] sm:$0xff]
          %1238 = vst [vmem:[%s744 + $0xf60] sm:$0xff] %v1237
          %v1239 = vld [vmem:[%s743 + $0xf70] sm:$0xff]
          %1240 = vst [vmem:[%s744 + $0xf70] sm:$0xff] %v1239
          %v1241 = vld [vmem:[%s743 + $0xf80] sm:$0xff]
          %1242 = vst [vmem:[%s744 + $0xf80] sm:$0xff] %v1241
          %v1243 = vld [vmem:[%s743 + $0xf90] sm:$0xff]
          %1244 = vst [vmem:[%s744 + $0xf90] sm:$0xff] %v1243
          %v1245 = vld [vmem:[%s743 + $0xfa0] sm:$0xff]
          %1246 = vst [vmem:[%s744 + $0xfa0] sm:$0xff] %v1245
          %v1247 = vld [vmem:[%s743 + $0xfb0] sm:$0xff]
          %1248 = vst [vmem:[%s744 + $0xfb0] sm:$0xff] %v1247
          %v1249 = vld [vmem:[%s743 + $0xfc0] sm:$0xff]
          %1250 = vst [vmem:[%s744 + $0xfc0] sm:$0xff] %v1249
          %v1251 = vld [vmem:[%s743 + $0xfd0] sm:$0xff]
          %1252 = vst [vmem:[%s744 + $0xfd0] sm:$0xff] %v1251
          %v1253 = vld [vmem:[%s743 + $0xfe0] sm:$0xff]
          %1254 = vst [vmem:[%s744 + $0xfe0] sm:$0xff] %v1253
          %v1255 = vld [vmem:[%s743 + $0xff0] sm:$0xff]
          %1256 = vst [vmem:[%s744 + $0xff0] sm:$0xff] %v1255
          %v1257 = vld [vmem:[%s743 + $0x1000] sm:$0xff]
          %1258 = vst [vmem:[%s744 + $0x1000] sm:$0xff] %v1257
          %v1259 = vld [vmem:[%s743 + $0x1010] sm:$0xff]
          %1260 = vst [vmem:[%s744 + $0x1010] sm:$0xff] %v1259
          %v1261 = vld [vmem:[%s743 + $0x1020] sm:$0xff]
          %1262 = vst [vmem:[%s744 + $0x1020] sm:$0xff] %v1261
          %v1263 = vld [vmem:[%s743 + $0x1030] sm:$0xff]
          %1264 = vst [vmem:[%s744 + $0x1030] sm:$0xff] %v1263
          %v1265 = vld [vmem:[%s743 + $0x1040] sm:$0xff]
          %1266 = vst [vmem:[%s744 + $0x1040] sm:$0xff] %v1265
          %v1267 = vld [vmem:[%s743 + $0x1050] sm:$0xff]
          %1268 = vst [vmem:[%s744 + $0x1050] sm:$0xff] %v1267
          %v1269 = vld [vmem:[%s743 + $0x1060] sm:$0xff]
          %1270 = vst [vmem:[%s744 + $0x1060] sm:$0xff] %v1269
          %v1271 = vld [vmem:[%s743 + $0x1070] sm:$0xff]
          %1272 = vst [vmem:[%s744 + $0x1070] sm:$0xff] %v1271
          %v1273 = vld [vmem:[%s743 + $0x1080] sm:$0xff]
          %1274 = vst [vmem:[%s744 + $0x1080] sm:$0xff] %v1273
          %v1275 = vld [vmem:[%s743 + $0x1090] sm:$0xff]
          %1276 = vst [vmem:[%s744 + $0x1090] sm:$0xff] %v1275
          %v1277 = vld [vmem:[%s743 + $0x10a0] sm:$0xff]
          %1278 = vst [vmem:[%s744 + $0x10a0] sm:$0xff] %v1277
          %v1279 = vld [vmem:[%s743 + $0x10b0] sm:$0xff]
          %1280 = vst [vmem:[%s744 + $0x10b0] sm:$0xff] %v1279
          %v1281 = vld [vmem:[%s743 + $0x10c0] sm:$0xff]
          %1282 = vst [vmem:[%s744 + $0x10c0] sm:$0xff] %v1281
          %v1283 = vld [vmem:[%s743 + $0x10d0] sm:$0xff]
          %1284 = vst [vmem:[%s744 + $0x10d0] sm:$0xff] %v1283
          %v1285 = vld [vmem:[%s743 + $0x10e0] sm:$0xff]
          %1286 = vst [vmem:[%s744 + $0x10e0] sm:$0xff] %v1285
          %v1287 = vld [vmem:[%s743 + $0x10f0] sm:$0xff]
          %1288 = vst [vmem:[%s744 + $0x10f0] sm:$0xff] %v1287
          %v1289 = vld [vmem:[%s743 + $0x1100] sm:$0xff]
          %1290 = vst [vmem:[%s744 + $0x1100] sm:$0xff] %v1289
          %v1291 = vld [vmem:[%s743 + $0x1110] sm:$0xff]
          %1292 = vst [vmem:[%s744 + $0x1110] sm:$0xff] %v1291
          %v1293 = vld [vmem:[%s743 + $0x1120] sm:$0xff]
          %1294 = vst [vmem:[%s744 + $0x1120] sm:$0xff] %v1293
          %v1295 = vld [vmem:[%s743 + $0x1130] sm:$0xff]
          %1296 = vst [vmem:[%s744 + $0x1130] sm:$0xff] %v1295
          %v1297 = vld [vmem:[%s743 + $0x1140] sm:$0xff]
          %1298 = vst [vmem:[%s744 + $0x1140] sm:$0xff] %v1297
          %v1299 = vld [vmem:[%s743 + $0x1150] sm:$0xff]
          %1300 = vst [vmem:[%s744 + $0x1150] sm:$0xff] %v1299
          %v1301 = vld [vmem:[%s743 + $0x1160] sm:$0xff]
          %1302 = vst [vmem:[%s744 + $0x1160] sm:$0xff] %v1301
          %v1303 = vld [vmem:[%s743 + $0x1170] sm:$0xff]
          %1304 = vst [vmem:[%s744 + $0x1170] sm:$0xff] %v1303
          %v1305 = vld [vmem:[%s743 + $0x1180] sm:$0xff]
          %1306 = vst [vmem:[%s744 + $0x1180] sm:$0xff] %v1305
          %v1307 = vld [vmem:[%s743 + $0x1190] sm:$0xff]
          %1308 = vst [vmem:[%s744 + $0x1190] sm:$0xff] %v1307
          %v1309 = vld [vmem:[%s743 + $0x11a0] sm:$0xff]
          %1310 = vst [vmem:[%s744 + $0x11a0] sm:$0xff] %v1309
          %v1311 = vld [vmem:[%s743 + $0x11b0] sm:$0xff]
          %1312 = vst [vmem:[%s744 + $0x11b0] sm:$0xff] %v1311
          %v1313 = vld [vmem:[%s743 + $0x11c0] sm:$0xff]
          %1314 = vst [vmem:[%s744 + $0x11c0] sm:$0xff] %v1313
          %v1315 = vld [vmem:[%s743 + $0x11d0] sm:$0xff]
          %1316 = vst [vmem:[%s744 + $0x11d0] sm:$0xff] %v1315
          %v1317 = vld [vmem:[%s743 + $0x11e0] sm:$0xff]
          %1318 = vst [vmem:[%s744 + $0x11e0] sm:$0xff] %v1317
          %v1319 = vld [vmem:[%s743 + $0x11f0] sm:$0xff]
          %1320 = vst [vmem:[%s744 + $0x11f0] sm:$0xff] %v1319
          %v1321 = vld [vmem:[%s743 + $0x1200] sm:$0xff]
          %1322 = vst [vmem:[%s744 + $0x1200] sm:$0xff] %v1321
          %v1323 = vld [vmem:[%s743 + $0x1210] sm:$0xff]
          %1324 = vst [vmem:[%s744 + $0x1210] sm:$0xff] %v1323
          %v1325 = vld [vmem:[%s743 + $0x1220] sm:$0xff]
          %1326 = vst [vmem:[%s744 + $0x1220] sm:$0xff] %v1325
          %v1327 = vld [vmem:[%s743 + $0x1230] sm:$0xff]
          %1328 = vst [vmem:[%s744 + $0x1230] sm:$0xff] %v1327
          %v1329 = vld [vmem:[%s743 + $0x1240] sm:$0xff]
          %1330 = vst [vmem:[%s744 + $0x1240] sm:$0xff] %v1329
          %v1331 = vld [vmem:[%s743 + $0x1250] sm:$0xff]
          %1332 = vst [vmem:[%s744 + $0x1250] sm:$0xff] %v1331
          %v1333 = vld [vmem:[%s743 + $0x1260] sm:$0xff]
          %1334 = vst [vmem:[%s744 + $0x1260] sm:$0xff] %v1333
          %v1335 = vld [vmem:[%s743 + $0x1270] sm:$0xff]
          %1336 = vst [vmem:[%s744 + $0x1270] sm:$0xff] %v1335
          %v1337 = vld [vmem:[%s743 + $0x1280] sm:$0xff]
          %1338 = vst [vmem:[%s744 + $0x1280] sm:$0xff] %v1337
          %v1339 = vld [vmem:[%s743 + $0x1290] sm:$0xff]
          %1340 = vst [vmem:[%s744 + $0x1290] sm:$0xff] %v1339
          %v1341 = vld [vmem:[%s743 + $0x12a0] sm:$0xff]
          %1342 = vst [vmem:[%s744 + $0x12a0] sm:$0xff] %v1341
          %v1343 = vld [vmem:[%s743 + $0x12b0] sm:$0xff]
          %1344 = vst [vmem:[%s744 + $0x12b0] sm:$0xff] %v1343
          %v1345 = vld [vmem:[%s743 + $0x12c0] sm:$0xff]
          %1346 = vst [vmem:[%s744 + $0x12c0] sm:$0xff] %v1345
          %v1347 = vld [vmem:[%s743 + $0x12d0] sm:$0xff]
          %1348 = vst [vmem:[%s744 + $0x12d0] sm:$0xff] %v1347
          %v1349 = vld [vmem:[%s743 + $0x12e0] sm:$0xff]
          %1350 = vst [vmem:[%s744 + $0x12e0] sm:$0xff] %v1349
          %v1351 = vld [vmem:[%s743 + $0x12f0] sm:$0xff]
          %1352 = vst [vmem:[%s744 + $0x12f0] sm:$0xff] %v1351
          %v1353 = vld [vmem:[%s743 + $0x1300] sm:$0xff]
          %1354 = vst [vmem:[%s744 + $0x1300] sm:$0xff] %v1353
          %v1355 = vld [vmem:[%s743 + $0x1310] sm:$0xff]
          %1356 = vst [vmem:[%s744 + $0x1310] sm:$0xff] %v1355
          %v1357 = vld [vmem:[%s743 + $0x1320] sm:$0xff]
          %1358 = vst [vmem:[%s744 + $0x1320] sm:$0xff] %v1357
          %v1359 = vld [vmem:[%s743 + $0x1330] sm:$0xff]
          %1360 = vst [vmem:[%s744 + $0x1330] sm:$0xff] %v1359
          %v1361 = vld [vmem:[%s743 + $0x1340] sm:$0xff]
          %1362 = vst [vmem:[%s744 + $0x1340] sm:$0xff] %v1361
          %v1363 = vld [vmem:[%s743 + $0x1350] sm:$0xff]
          %1364 = vst [vmem:[%s744 + $0x1350] sm:$0xff] %v1363
          %v1365 = vld [vmem:[%s743 + $0x1360] sm:$0xff]
          %1366 = vst [vmem:[%s744 + $0x1360] sm:$0xff] %v1365
          %v1367 = vld [vmem:[%s743 + $0x1370] sm:$0xff]
          %1368 = vst [vmem:[%s744 + $0x1370] sm:$0xff] %v1367
          %v1369 = vld [vmem:[%s743 + $0x1380] sm:$0xff]
          %1370 = vst [vmem:[%s744 + $0x1380] sm:$0xff] %v1369
          %v1371 = vld [vmem:[%s743 + $0x1390] sm:$0xff]
          %1372 = vst [vmem:[%s744 + $0x1390] sm:$0xff] %v1371
          %v1373 = vld [vmem:[%s743 + $0x13a0] sm:$0xff]
          %1374 = vst [vmem:[%s744 + $0x13a0] sm:$0xff] %v1373
          %v1375 = vld [vmem:[%s743 + $0x13b0] sm:$0xff]
          %1376 = vst [vmem:[%s744 + $0x13b0] sm:$0xff] %v1375
          %v1377 = vld [vmem:[%s743 + $0x13c0] sm:$0xff]
          %1378 = vst [vmem:[%s744 + $0x13c0] sm:$0xff] %v1377
          %v1379 = vld [vmem:[%s743 + $0x13d0] sm:$0xff]
          %1380 = vst [vmem:[%s744 + $0x13d0] sm:$0xff] %v1379
          %v1381 = vld [vmem:[%s743 + $0x13e0] sm:$0xff]
          %1382 = vst [vmem:[%s744 + $0x13e0] sm:$0xff] %v1381
          %v1383 = vld [vmem:[%s743 + $0x13f0] sm:$0xff]
          %1384 = vst [vmem:[%s744 + $0x13f0] sm:$0xff] %v1383
          %v1385 = vld [vmem:[%s743 + $0x1400] sm:$0xff]
          %1386 = vst [vmem:[%s744 + $0x1400] sm:$0xff] %v1385
          %v1387 = vld [vmem:[%s743 + $0x1410] sm:$0xff]
          %1388 = vst [vmem:[%s744 + $0x1410] sm:$0xff] %v1387
          %v1389 = vld [vmem:[%s743 + $0x1420] sm:$0xff]
          %1390 = vst [vmem:[%s744 + $0x1420] sm:$0xff] %v1389
          %v1391 = vld [vmem:[%s743 + $0x1430] sm:$0xff]
          %1392 = vst [vmem:[%s744 + $0x1430] sm:$0xff] %v1391
          %v1393 = vld [vmem:[%s743 + $0x1440] sm:$0xff]
          %1394 = vst [vmem:[%s744 + $0x1440] sm:$0xff] %v1393
          %v1395 = vld [vmem:[%s743 + $0x1450] sm:$0xff]
          %1396 = vst [vmem:[%s744 + $0x1450] sm:$0xff] %v1395
          %v1397 = vld [vmem:[%s743 + $0x1460] sm:$0xff]
          %1398 = vst [vmem:[%s744 + $0x1460] sm:$0xff] %v1397
          %v1399 = vld [vmem:[%s743 + $0x1470] sm:$0xff]
          %1400 = vst [vmem:[%s744 + $0x1470] sm:$0xff] %v1399
          %v1401 = vld [vmem:[%s743 + $0x1480] sm:$0xff]
          %1402 = vst [vmem:[%s744 + $0x1480] sm:$0xff] %v1401
          %v1403 = vld [vmem:[%s743 + $0x1490] sm:$0xff]
          %1404 = vst [vmem:[%s744 + $0x1490] sm:$0xff] %v1403
          %v1405 = vld [vmem:[%s743 + $0x14a0] sm:$0xff]
          %1406 = vst [vmem:[%s744 + $0x14a0] sm:$0xff] %v1405
          %v1407 = vld [vmem:[%s743 + $0x14b0] sm:$0xff]
          %1408 = vst [vmem:[%s744 + $0x14b0] sm:$0xff] %v1407
          %v1409 = vld [vmem:[%s743 + $0x14c0] sm:$0xff]
          %1410 = vst [vmem:[%s744 + $0x14c0] sm:$0xff] %v1409
          %v1411 = vld [vmem:[%s743 + $0x14d0] sm:$0xff]
          %1412 = vst [vmem:[%s744 + $0x14d0] sm:$0xff] %v1411
          %v1413 = vld [vmem:[%s743 + $0x14e0] sm:$0xff]
          %1414 = vst [vmem:[%s744 + $0x14e0] sm:$0xff] %v1413
          %v1415 = vld [vmem:[%s743 + $0x14f0] sm:$0xff]
          %1416 = vst [vmem:[%s744 + $0x14f0] sm:$0xff] %v1415
          %v1417 = vld [vmem:[%s743 + $0x1500] sm:$0xff]
          %1418 = vst [vmem:[%s744 + $0x1500] sm:$0xff] %v1417
          %v1419 = vld [vmem:[%s743 + $0x1510] sm:$0xff]
          %1420 = vst [vmem:[%s744 + $0x1510] sm:$0xff] %v1419
          %v1421 = vld [vmem:[%s743 + $0x1520] sm:$0xff]
          %1422 = vst [vmem:[%s744 + $0x1520] sm:$0xff] %v1421
          %v1423 = vld [vmem:[%s743 + $0x1530] sm:$0xff]
          %1424 = vst [vmem:[%s744 + $0x1530] sm:$0xff] %v1423
          %v1425 = vld [vmem:[%s743 + $0x1540] sm:$0xff]
          %1426 = vst [vmem:[%s744 + $0x1540] sm:$0xff] %v1425
          %v1427 = vld [vmem:[%s743 + $0x1550] sm:$0xff]
          %1428 = vst [vmem:[%s744 + $0x1550] sm:$0xff] %v1427
          %v1429 = vld [vmem:[%s743 + $0x1560] sm:$0xff]
          %1430 = vst [vmem:[%s744 + $0x1560] sm:$0xff] %v1429
          %v1431 = vld [vmem:[%s743 + $0x1570] sm:$0xff]
          %1432 = vst [vmem:[%s744 + $0x1570] sm:$0xff] %v1431
          %v1433 = vld [vmem:[%s743 + $0x1580] sm:$0xff]
          %1434 = vst [vmem:[%s744 + $0x1580] sm:$0xff] %v1433
          %v1435 = vld [vmem:[%s743 + $0x1590] sm:$0xff]
          %1436 = vst [vmem:[%s744 + $0x1590] sm:$0xff] %v1435
          %v1437 = vld [vmem:[%s743 + $0x15a0] sm:$0xff]
          %1438 = vst [vmem:[%s744 + $0x15a0] sm:$0xff] %v1437
          %v1439 = vld [vmem:[%s743 + $0x15b0] sm:$0xff]
          %1440 = vst [vmem:[%s744 + $0x15b0] sm:$0xff] %v1439
          %v1441 = vld [vmem:[%s743 + $0x15c0] sm:$0xff]
          %1442 = vst [vmem:[%s744 + $0x15c0] sm:$0xff] %v1441
          %v1443 = vld [vmem:[%s743 + $0x15d0] sm:$0xff]
          %1444 = vst [vmem:[%s744 + $0x15d0] sm:$0xff] %v1443
          %v1445 = vld [vmem:[%s743 + $0x15e0] sm:$0xff]
          %1446 = vst [vmem:[%s744 + $0x15e0] sm:$0xff] %v1445
          %v1447 = vld [vmem:[%s743 + $0x15f0] sm:$0xff]
          %1448 = vst [vmem:[%s744 + $0x15f0] sm:$0xff] %v1447
        $region26: #{tpu_custom_call.1} parent=20 // loop_footer
          %s742 = sadd.s32 1, %s738
        $region27: #{tpu_custom_call.1} parent=20 // loop_footer_branch
          %737 = sbr.rel target = $region23
        $region28: #{tpu_custom_call.1} parent=20 // loop_exit
          _
        %s1449 = sshllo.u32 0, %s732
        loop: start=0, step=1, limit=1
        $region29: #{tpu_custom_call.1} parent=20 // loop_pre_header
          _
        $region30: #{tpu_custom_call.1} parent=20 // loop_header
          %s1451 = sphi 0, %s1455
          %p1452 = scmp.ge.s32.totalorder %s1451, 1
          %s1456 = sphi %s734, %s734
          %s1457 = sphi %s736, %s736
        $region31: #{tpu_custom_call.1} parent=20 // loop_header_branch
          %1454 = sbr.rel (%p1452) target = $region35
        $region32: #{tpu_custom_call.1} parent=20 // loop_body
          %v1458 = vld [vmem:[%s1456] sm:%s1449]
          %1459 = vst [vmem:[%s1457] sm:%s1449] %v1458
          %v1460 = vld [vmem:[%s1456 + $0x10] sm:%s1449]
          %1461 = vst [vmem:[%s1457 + $0x10] sm:%s1449] %v1460
          %v1462 = vld [vmem:[%s1456 + $0x20] sm:%s1449]
          %1463 = vst [vmem:[%s1457 + $0x20] sm:%s1449] %v1462
          %v1464 = vld [vmem:[%s1456 + $0x30] sm:%s1449]
          %1465 = vst [vmem:[%s1457 + $0x30] sm:%s1449] %v1464
          %v1466 = vld [vmem:[%s1456 + $0x40] sm:%s1449]
          %1467 = vst [vmem:[%s1457 + $0x40] sm:%s1449] %v1466
          %v1468 = vld [vmem:[%s1456 + $0x50] sm:%s1449]
          %1469 = vst [vmem:[%s1457 + $0x50] sm:%s1449] %v1468
          %v1470 = vld [vmem:[%s1456 + $0x60] sm:%s1449]
          %1471 = vst [vmem:[%s1457 + $0x60] sm:%s1449] %v1470
          %v1472 = vld [vmem:[%s1456 + $0x70] sm:%s1449]
          %1473 = vst [vmem:[%s1457 + $0x70] sm:%s1449] %v1472
          %v1474 = vld [vmem:[%s1456 + $0x80] sm:%s1449]
          %1475 = vst [vmem:[%s1457 + $0x80] sm:%s1449] %v1474
          %v1476 = vld [vmem:[%s1456 + $0x90] sm:%s1449]
          %1477 = vst [vmem:[%s1457 + $0x90] sm:%s1449] %v1476
          %v1478 = vld [vmem:[%s1456 + $0xa0] sm:%s1449]
          %1479 = vst [vmem:[%s1457 + $0xa0] sm:%s1449] %v1478
          %v1480 = vld [vmem:[%s1456 + $0xb0] sm:%s1449]
          %1481 = vst [vmem:[%s1457 + $0xb0] sm:%s1449] %v1480
          %v1482 = vld [vmem:[%s1456 + $0xc0] sm:%s1449]
          %1483 = vst [vmem:[%s1457 + $0xc0] sm:%s1449] %v1482
          %v1484 = vld [vmem:[%s1456 + $0xd0] sm:%s1449]
          %1485 = vst [vmem:[%s1457 + $0xd0] sm:%s1449] %v1484
          %v1486 = vld [vmem:[%s1456 + $0xe0] sm:%s1449]
          %1487 = vst [vmem:[%s1457 + $0xe0] sm:%s1449] %v1486
          %v1488 = vld [vmem:[%s1456 + $0xf0] sm:%s1449]
          %1489 = vst [vmem:[%s1457 + $0xf0] sm:%s1449] %v1488
          %v1490 = vld [vmem:[%s1456 + $0x100] sm:%s1449]
          %1491 = vst [vmem:[%s1457 + $0x100] sm:%s1449] %v1490
          %v1492 = vld [vmem:[%s1456 + $0x110] sm:%s1449]
          %1493 = vst [vmem:[%s1457 + $0x110] sm:%s1449] %v1492
          %v1494 = vld [vmem:[%s1456 + $0x120] sm:%s1449]
          %1495 = vst [vmem:[%s1457 + $0x120] sm:%s1449] %v1494
          %v1496 = vld [vmem:[%s1456 + $0x130] sm:%s1449]
          %1497 = vst [vmem:[%s1457 + $0x130] sm:%s1449] %v1496
          %v1498 = vld [vmem:[%s1456 + $0x140] sm:%s1449]
          %1499 = vst [vmem:[%s1457 + $0x140] sm:%s1449] %v1498
          %v1500 = vld [vmem:[%s1456 + $0x150] sm:%s1449]
          %1501 = vst [vmem:[%s1457 + $0x150] sm:%s1449] %v1500
          %v1502 = vld [vmem:[%s1456 + $0x160] sm:%s1449]
          %1503 = vst [vmem:[%s1457 + $0x160] sm:%s1449] %v1502
          %v1504 = vld [vmem:[%s1456 + $0x170] sm:%s1449]
          %1505 = vst [vmem:[%s1457 + $0x170] sm:%s1449] %v1504
          %v1506 = vld [vmem:[%s1456 + $0x180] sm:%s1449]
          %1507 = vst [vmem:[%s1457 + $0x180] sm:%s1449] %v1506
          %v1508 = vld [vmem:[%s1456 + $0x190] sm:%s1449]
          %1509 = vst [vmem:[%s1457 + $0x190] sm:%s1449] %v1508
          %v1510 = vld [vmem:[%s1456 + $0x1a0] sm:%s1449]
          %1511 = vst [vmem:[%s1457 + $0x1a0] sm:%s1449] %v1510
          %v1512 = vld [vmem:[%s1456 + $0x1b0] sm:%s1449]
          %1513 = vst [vmem:[%s1457 + $0x1b0] sm:%s1449] %v1512
          %v1514 = vld [vmem:[%s1456 + $0x1c0] sm:%s1449]
          %1515 = vst [vmem:[%s1457 + $0x1c0] sm:%s1449] %v1514
          %v1516 = vld [vmem:[%s1456 + $0x1d0] sm:%s1449]
          %1517 = vst [vmem:[%s1457 + $0x1d0] sm:%s1449] %v1516
          %v1518 = vld [vmem:[%s1456 + $0x1e0] sm:%s1449]
          %1519 = vst [vmem:[%s1457 + $0x1e0] sm:%s1449] %v1518
          %v1520 = vld [vmem:[%s1456 + $0x1f0] sm:%s1449]
          %1521 = vst [vmem:[%s1457 + $0x1f0] sm:%s1449] %v1520
          %v1522 = vld [vmem:[%s1456 + $0x200] sm:%s1449]
          %1523 = vst [vmem:[%s1457 + $0x200] sm:%s1449] %v1522
          %v1524 = vld [vmem:[%s1456 + $0x210] sm:%s1449]
          %1525 = vst [vmem:[%s1457 + $0x210] sm:%s1449] %v1524
          %v1526 = vld [vmem:[%s1456 + $0x220] sm:%s1449]
          %1527 = vst [vmem:[%s1457 + $0x220] sm:%s1449] %v1526
          %v1528 = vld [vmem:[%s1456 + $0x230] sm:%s1449]
          %1529 = vst [vmem:[%s1457 + $0x230] sm:%s1449] %v1528
          %v1530 = vld [vmem:[%s1456 + $0x240] sm:%s1449]
          %1531 = vst [vmem:[%s1457 + $0x240] sm:%s1449] %v1530
          %v1532 = vld [vmem:[%s1456 + $0x250] sm:%s1449]
          %1533 = vst [vmem:[%s1457 + $0x250] sm:%s1449] %v1532
          %v1534 = vld [vmem:[%s1456 + $0x260] sm:%s1449]
          %1535 = vst [vmem:[%s1457 + $0x260] sm:%s1449] %v1534
          %v1536 = vld [vmem:[%s1456 + $0x270] sm:%s1449]
          %1537 = vst [vmem:[%s1457 + $0x270] sm:%s1449] %v1536
          %v1538 = vld [vmem:[%s1456 + $0x280] sm:%s1449]
          %1539 = vst [vmem:[%s1457 + $0x280] sm:%s1449] %v1538
          %v1540 = vld [vmem:[%s1456 + $0x290] sm:%s1449]
          %1541 = vst [vmem:[%s1457 + $0x290] sm:%s1449] %v1540
          %v1542 = vld [vmem:[%s1456 + $0x2a0] sm:%s1449]
          %1543 = vst [vmem:[%s1457 + $0x2a0] sm:%s1449] %v1542
          %v1544 = vld [vmem:[%s1456 + $0x2b0] sm:%s1449]
          %1545 = vst [vmem:[%s1457 + $0x2b0] sm:%s1449] %v1544
          %v1546 = vld [vmem:[%s1456 + $0x2c0] sm:%s1449]
          %1547 = vst [vmem:[%s1457 + $0x2c0] sm:%s1449] %v1546
          %v1548 = vld [vmem:[%s1456 + $0x2d0] sm:%s1449]
          %1549 = vst [vmem:[%s1457 + $0x2d0] sm:%s1449] %v1548
          %v1550 = vld [vmem:[%s1456 + $0x2e0] sm:%s1449]
          %1551 = vst [vmem:[%s1457 + $0x2e0] sm:%s1449] %v1550
          %v1552 = vld [vmem:[%s1456 + $0x2f0] sm:%s1449]
          %1553 = vst [vmem:[%s1457 + $0x2f0] sm:%s1449] %v1552
          %v1554 = vld [vmem:[%s1456 + $0x300] sm:%s1449]
          %1555 = vst [vmem:[%s1457 + $0x300] sm:%s1449] %v1554
          %v1556 = vld [vmem:[%s1456 + $0x310] sm:%s1449]
          %1557 = vst [vmem:[%s1457 + $0x310] sm:%s1449] %v1556
          %v1558 = vld [vmem:[%s1456 + $0x320] sm:%s1449]
          %1559 = vst [vmem:[%s1457 + $0x320] sm:%s1449] %v1558
          %v1560 = vld [vmem:[%s1456 + $0x330] sm:%s1449]
          %1561 = vst [vmem:[%s1457 + $0x330] sm:%s1449] %v1560
          %v1562 = vld [vmem:[%s1456 + $0x340] sm:%s1449]
          %1563 = vst [vmem:[%s1457 + $0x340] sm:%s1449] %v1562
          %v1564 = vld [vmem:[%s1456 + $0x350] sm:%s1449]
          %1565 = vst [vmem:[%s1457 + $0x350] sm:%s1449] %v1564
          %v1566 = vld [vmem:[%s1456 + $0x360] sm:%s1449]
          %1567 = vst [vmem:[%s1457 + $0x360] sm:%s1449] %v1566
          %v1568 = vld [vmem:[%s1456 + $0x370] sm:%s1449]
          %1569 = vst [vmem:[%s1457 + $0x370] sm:%s1449] %v1568
          %v1570 = vld [vmem:[%s1456 + $0x380] sm:%s1449]
          %1571 = vst [vmem:[%s1457 + $0x380] sm:%s1449] %v1570
          %v1572 = vld [vmem:[%s1456 + $0x390] sm:%s1449]
          %1573 = vst [vmem:[%s1457 + $0x390] sm:%s1449] %v1572
          %v1574 = vld [vmem:[%s1456 + $0x3a0] sm:%s1449]
          %1575 = vst [vmem:[%s1457 + $0x3a0] sm:%s1449] %v1574
          %v1576 = vld [vmem:[%s1456 + $0x3b0] sm:%s1449]
          %1577 = vst [vmem:[%s1457 + $0x3b0] sm:%s1449] %v1576
          %v1578 = vld [vmem:[%s1456 + $0x3c0] sm:%s1449]
          %1579 = vst [vmem:[%s1457 + $0x3c0] sm:%s1449] %v1578
          %v1580 = vld [vmem:[%s1456 + $0x3d0] sm:%s1449]
          %1581 = vst [vmem:[%s1457 + $0x3d0] sm:%s1449] %v1580
          %v1582 = vld [vmem:[%s1456 + $0x3e0] sm:%s1449]
          %1583 = vst [vmem:[%s1457 + $0x3e0] sm:%s1449] %v1582
          %v1584 = vld [vmem:[%s1456 + $0x3f0] sm:%s1449]
          %1585 = vst [vmem:[%s1457 + $0x3f0] sm:%s1449] %v1584
          %v1586 = vld [vmem:[%s1456 + $0x400] sm:%s1449]
          %1587 = vst [vmem:[%s1457 + $0x400] sm:%s1449] %v1586
          %v1588 = vld [vmem:[%s1456 + $0x410] sm:%s1449]
          %1589 = vst [vmem:[%s1457 + $0x410] sm:%s1449] %v1588
          %v1590 = vld [vmem:[%s1456 + $0x420] sm:%s1449]
          %1591 = vst [vmem:[%s1457 + $0x420] sm:%s1449] %v1590
          %v1592 = vld [vmem:[%s1456 + $0x430] sm:%s1449]
          %1593 = vst [vmem:[%s1457 + $0x430] sm:%s1449] %v1592
          %v1594 = vld [vmem:[%s1456 + $0x440] sm:%s1449]
          %1595 = vst [vmem:[%s1457 + $0x440] sm:%s1449] %v1594
          %v1596 = vld [vmem:[%s1456 + $0x450] sm:%s1449]
          %1597 = vst [vmem:[%s1457 + $0x450] sm:%s1449] %v1596
          %v1598 = vld [vmem:[%s1456 + $0x460] sm:%s1449]
          %1599 = vst [vmem:[%s1457 + $0x460] sm:%s1449] %v1598
          %v1600 = vld [vmem:[%s1456 + $0x470] sm:%s1449]
          %1601 = vst [vmem:[%s1457 + $0x470] sm:%s1449] %v1600
          %v1602 = vld [vmem:[%s1456 + $0x480] sm:%s1449]
          %1603 = vst [vmem:[%s1457 + $0x480] sm:%s1449] %v1602
          %v1604 = vld [vmem:[%s1456 + $0x490] sm:%s1449]
          %1605 = vst [vmem:[%s1457 + $0x490] sm:%s1449] %v1604
          %v1606 = vld [vmem:[%s1456 + $0x4a0] sm:%s1449]
          %1607 = vst [vmem:[%s1457 + $0x4a0] sm:%s1449] %v1606
          %v1608 = vld [vmem:[%s1456 + $0x4b0] sm:%s1449]
          %1609 = vst [vmem:[%s1457 + $0x4b0] sm:%s1449] %v1608
          %v1610 = vld [vmem:[%s1456 + $0x4c0] sm:%s1449]
          %1611 = vst [vmem:[%s1457 + $0x4c0] sm:%s1449] %v1610
          %v1612 = vld [vmem:[%s1456 + $0x4d0] sm:%s1449]
          %1613 = vst [vmem:[%s1457 + $0x4d0] sm:%s1449] %v1612
          %v1614 = vld [vmem:[%s1456 + $0x4e0] sm:%s1449]
          %1615 = vst [vmem:[%s1457 + $0x4e0] sm:%s1449] %v1614
          %v1616 = vld [vmem:[%s1456 + $0x4f0] sm:%s1449]
          %1617 = vst [vmem:[%s1457 + $0x4f0] sm:%s1449] %v1616
          %v1618 = vld [vmem:[%s1456 + $0x500] sm:%s1449]
          %1619 = vst [vmem:[%s1457 + $0x500] sm:%s1449] %v1618
          %v1620 = vld [vmem:[%s1456 + $0x510] sm:%s1449]
          %1621 = vst [vmem:[%s1457 + $0x510] sm:%s1449] %v1620
          %v1622 = vld [vmem:[%s1456 + $0x520] sm:%s1449]
          %1623 = vst [vmem:[%s1457 + $0x520] sm:%s1449] %v1622
          %v1624 = vld [vmem:[%s1456 + $0x530] sm:%s1449]
          %1625 = vst [vmem:[%s1457 + $0x530] sm:%s1449] %v1624
          %v1626 = vld [vmem:[%s1456 + $0x540] sm:%s1449]
          %1627 = vst [vmem:[%s1457 + $0x540] sm:%s1449] %v1626
          %v1628 = vld [vmem:[%s1456 + $0x550] sm:%s1449]
          %1629 = vst [vmem:[%s1457 + $0x550] sm:%s1449] %v1628
          %v1630 = vld [vmem:[%s1456 + $0x560] sm:%s1449]
          %1631 = vst [vmem:[%s1457 + $0x560] sm:%s1449] %v1630
          %v1632 = vld [vmem:[%s1456 + $0x570] sm:%s1449]
          %1633 = vst [vmem:[%s1457 + $0x570] sm:%s1449] %v1632
          %v1634 = vld [vmem:[%s1456 + $0x580] sm:%s1449]
          %1635 = vst [vmem:[%s1457 + $0x580] sm:%s1449] %v1634
          %v1636 = vld [vmem:[%s1456 + $0x590] sm:%s1449]
          %1637 = vst [vmem:[%s1457 + $0x590] sm:%s1449] %v1636
          %v1638 = vld [vmem:[%s1456 + $0x5a0] sm:%s1449]
          %1639 = vst [vmem:[%s1457 + $0x5a0] sm:%s1449] %v1638
          %v1640 = vld [vmem:[%s1456 + $0x5b0] sm:%s1449]
          %1641 = vst [vmem:[%s1457 + $0x5b0] sm:%s1449] %v1640
          %v1642 = vld [vmem:[%s1456 + $0x5c0] sm:%s1449]
          %1643 = vst [vmem:[%s1457 + $0x5c0] sm:%s1449] %v1642
          %v1644 = vld [vmem:[%s1456 + $0x5d0] sm:%s1449]
          %1645 = vst [vmem:[%s1457 + $0x5d0] sm:%s1449] %v1644
          %v1646 = vld [vmem:[%s1456 + $0x5e0] sm:%s1449]
          %1647 = vst [vmem:[%s1457 + $0x5e0] sm:%s1449] %v1646
          %v1648 = vld [vmem:[%s1456 + $0x5f0] sm:%s1449]
          %1649 = vst [vmem:[%s1457 + $0x5f0] sm:%s1449] %v1648
          %v1650 = vld [vmem:[%s1456 + $0x600] sm:%s1449]
          %1651 = vst [vmem:[%s1457 + $0x600] sm:%s1449] %v1650
          %v1652 = vld [vmem:[%s1456 + $0x610] sm:%s1449]
          %1653 = vst [vmem:[%s1457 + $0x610] sm:%s1449] %v1652
          %v1654 = vld [vmem:[%s1456 + $0x620] sm:%s1449]
          %1655 = vst [vmem:[%s1457 + $0x620] sm:%s1449] %v1654
          %v1656 = vld [vmem:[%s1456 + $0x630] sm:%s1449]
          %1657 = vst [vmem:[%s1457 + $0x630] sm:%s1449] %v1656
          %v1658 = vld [vmem:[%s1456 + $0x640] sm:%s1449]
          %1659 = vst [vmem:[%s1457 + $0x640] sm:%s1449] %v1658
          %v1660 = vld [vmem:[%s1456 + $0x650] sm:%s1449]
          %1661 = vst [vmem:[%s1457 + $0x650] sm:%s1449] %v1660
          %v1662 = vld [vmem:[%s1456 + $0x660] sm:%s1449]
          %1663 = vst [vmem:[%s1457 + $0x660] sm:%s1449] %v1662
          %v1664 = vld [vmem:[%s1456 + $0x670] sm:%s1449]
          %1665 = vst [vmem:[%s1457 + $0x670] sm:%s1449] %v1664
          %v1666 = vld [vmem:[%s1456 + $0x680] sm:%s1449]
          %1667 = vst [vmem:[%s1457 + $0x680] sm:%s1449] %v1666
          %v1668 = vld [vmem:[%s1456 + $0x690] sm:%s1449]
          %1669 = vst [vmem:[%s1457 + $0x690] sm:%s1449] %v1668
          %v1670 = vld [vmem:[%s1456 + $0x6a0] sm:%s1449]
          %1671 = vst [vmem:[%s1457 + $0x6a0] sm:%s1449] %v1670
          %v1672 = vld [vmem:[%s1456 + $0x6b0] sm:%s1449]
          %1673 = vst [vmem:[%s1457 + $0x6b0] sm:%s1449] %v1672
          %v1674 = vld [vmem:[%s1456 + $0x6c0] sm:%s1449]
          %1675 = vst [vmem:[%s1457 + $0x6c0] sm:%s1449] %v1674
          %v1676 = vld [vmem:[%s1456 + $0x6d0] sm:%s1449]
          %1677 = vst [vmem:[%s1457 + $0x6d0] sm:%s1449] %v1676
          %v1678 = vld [vmem:[%s1456 + $0x6e0] sm:%s1449]
          %1679 = vst [vmem:[%s1457 + $0x6e0] sm:%s1449] %v1678
          %v1680 = vld [vmem:[%s1456 + $0x6f0] sm:%s1449]
          %1681 = vst [vmem:[%s1457 + $0x6f0] sm:%s1449] %v1680
          %v1682 = vld [vmem:[%s1456 + $0x700] sm:%s1449]
          %1683 = vst [vmem:[%s1457 + $0x700] sm:%s1449] %v1682
          %v1684 = vld [vmem:[%s1456 + $0x710] sm:%s1449]
          %1685 = vst [vmem:[%s1457 + $0x710] sm:%s1449] %v1684
          %v1686 = vld [vmem:[%s1456 + $0x720] sm:%s1449]
          %1687 = vst [vmem:[%s1457 + $0x720] sm:%s1449] %v1686
          %v1688 = vld [vmem:[%s1456 + $0x730] sm:%s1449]
          %1689 = vst [vmem:[%s1457 + $0x730] sm:%s1449] %v1688
          %v1690 = vld [vmem:[%s1456 + $0x740] sm:%s1449]
          %1691 = vst [vmem:[%s1457 + $0x740] sm:%s1449] %v1690
          %v1692 = vld [vmem:[%s1456 + $0x750] sm:%s1449]
          %1693 = vst [vmem:[%s1457 + $0x750] sm:%s1449] %v1692
          %v1694 = vld [vmem:[%s1456 + $0x760] sm:%s1449]
          %1695 = vst [vmem:[%s1457 + $0x760] sm:%s1449] %v1694
          %v1696 = vld [vmem:[%s1456 + $0x770] sm:%s1449]
          %1697 = vst [vmem:[%s1457 + $0x770] sm:%s1449] %v1696
          %v1698 = vld [vmem:[%s1456 + $0x780] sm:%s1449]
          %1699 = vst [vmem:[%s1457 + $0x780] sm:%s1449] %v1698
          %v1700 = vld [vmem:[%s1456 + $0x790] sm:%s1449]
          %1701 = vst [vmem:[%s1457 + $0x790] sm:%s1449] %v1700
          %v1702 = vld [vmem:[%s1456 + $0x7a0] sm:%s1449]
          %1703 = vst [vmem:[%s1457 + $0x7a0] sm:%s1449] %v1702
          %v1704 = vld [vmem:[%s1456 + $0x7b0] sm:%s1449]
          %1705 = vst [vmem:[%s1457 + $0x7b0] sm:%s1449] %v1704
          %v1706 = vld [vmem:[%s1456 + $0x7c0] sm:%s1449]
          %1707 = vst [vmem:[%s1457 + $0x7c0] sm:%s1449] %v1706
          %v1708 = vld [vmem:[%s1456 + $0x7d0] sm:%s1449]
          %1709 = vst [vmem:[%s1457 + $0x7d0] sm:%s1449] %v1708
          %v1710 = vld [vmem:[%s1456 + $0x7e0] sm:%s1449]
          %1711 = vst [vmem:[%s1457 + $0x7e0] sm:%s1449] %v1710
          %v1712 = vld [vmem:[%s1456 + $0x7f0] sm:%s1449]
          %1713 = vst [vmem:[%s1457 + $0x7f0] sm:%s1449] %v1712
          %v1714 = vld [vmem:[%s1456 + $0x800] sm:%s1449]
          %1715 = vst [vmem:[%s1457 + $0x800] sm:%s1449] %v1714
          %v1716 = vld [vmem:[%s1456 + $0x810] sm:%s1449]
          %1717 = vst [vmem:[%s1457 + $0x810] sm:%s1449] %v1716
          %v1718 = vld [vmem:[%s1456 + $0x820] sm:%s1449]
          %1719 = vst [vmem:[%s1457 + $0x820] sm:%s1449] %v1718
          %v1720 = vld [vmem:[%s1456 + $0x830] sm:%s1449]
          %1721 = vst [vmem:[%s1457 + $0x830] sm:%s1449] %v1720
          %v1722 = vld [vmem:[%s1456 + $0x840] sm:%s1449]
          %1723 = vst [vmem:[%s1457 + $0x840] sm:%s1449] %v1722
          %v1724 = vld [vmem:[%s1456 + $0x850] sm:%s1449]
          %1725 = vst [vmem:[%s1457 + $0x850] sm:%s1449] %v1724
          %v1726 = vld [vmem:[%s1456 + $0x860] sm:%s1449]
          %1727 = vst [vmem:[%s1457 + $0x860] sm:%s1449] %v1726
          %v1728 = vld [vmem:[%s1456 + $0x870] sm:%s1449]
          %1729 = vst [vmem:[%s1457 + $0x870] sm:%s1449] %v1728
          %v1730 = vld [vmem:[%s1456 + $0x880] sm:%s1449]
          %1731 = vst [vmem:[%s1457 + $0x880] sm:%s1449] %v1730
          %v1732 = vld [vmem:[%s1456 + $0x890] sm:%s1449]
          %1733 = vst [vmem:[%s1457 + $0x890] sm:%s1449] %v1732
          %v1734 = vld [vmem:[%s1456 + $0x8a0] sm:%s1449]
          %1735 = vst [vmem:[%s1457 + $0x8a0] sm:%s1449] %v1734
          %v1736 = vld [vmem:[%s1456 + $0x8b0] sm:%s1449]
          %1737 = vst [vmem:[%s1457 + $0x8b0] sm:%s1449] %v1736
          %v1738 = vld [vmem:[%s1456 + $0x8c0] sm:%s1449]
          %1739 = vst [vmem:[%s1457 + $0x8c0] sm:%s1449] %v1738
          %v1740 = vld [vmem:[%s1456 + $0x8d0] sm:%s1449]
          %1741 = vst [vmem:[%s1457 + $0x8d0] sm:%s1449] %v1740
          %v1742 = vld [vmem:[%s1456 + $0x8e0] sm:%s1449]
          %1743 = vst [vmem:[%s1457 + $0x8e0] sm:%s1449] %v1742
          %v1744 = vld [vmem:[%s1456 + $0x8f0] sm:%s1449]
          %1745 = vst [vmem:[%s1457 + $0x8f0] sm:%s1449] %v1744
          %v1746 = vld [vmem:[%s1456 + $0x900] sm:%s1449]
          %1747 = vst [vmem:[%s1457 + $0x900] sm:%s1449] %v1746
          %v1748 = vld [vmem:[%s1456 + $0x910] sm:%s1449]
          %1749 = vst [vmem:[%s1457 + $0x910] sm:%s1449] %v1748
          %v1750 = vld [vmem:[%s1456 + $0x920] sm:%s1449]
          %1751 = vst [vmem:[%s1457 + $0x920] sm:%s1449] %v1750
          %v1752 = vld [vmem:[%s1456 + $0x930] sm:%s1449]
          %1753 = vst [vmem:[%s1457 + $0x930] sm:%s1449] %v1752
          %v1754 = vld [vmem:[%s1456 + $0x940] sm:%s1449]
          %1755 = vst [vmem:[%s1457 + $0x940] sm:%s1449] %v1754
          %v1756 = vld [vmem:[%s1456 + $0x950] sm:%s1449]
          %1757 = vst [vmem:[%s1457 + $0x950] sm:%s1449] %v1756
          %v1758 = vld [vmem:[%s1456 + $0x960] sm:%s1449]
          %1759 = vst [vmem:[%s1457 + $0x960] sm:%s1449] %v1758
          %v1760 = vld [vmem:[%s1456 + $0x970] sm:%s1449]
          %1761 = vst [vmem:[%s1457 + $0x970] sm:%s1449] %v1760
          %v1762 = vld [vmem:[%s1456 + $0x980] sm:%s1449]
          %1763 = vst [vmem:[%s1457 + $0x980] sm:%s1449] %v1762
          %v1764 = vld [vmem:[%s1456 + $0x990] sm:%s1449]
          %1765 = vst [vmem:[%s1457 + $0x990] sm:%s1449] %v1764
          %v1766 = vld [vmem:[%s1456 + $0x9a0] sm:%s1449]
          %1767 = vst [vmem:[%s1457 + $0x9a0] sm:%s1449] %v1766
          %v1768 = vld [vmem:[%s1456 + $0x9b0] sm:%s1449]
          %1769 = vst [vmem:[%s1457 + $0x9b0] sm:%s1449] %v1768
          %v1770 = vld [vmem:[%s1456 + $0x9c0] sm:%s1449]
          %1771 = vst [vmem:[%s1457 + $0x9c0] sm:%s1449] %v1770
          %v1772 = vld [vmem:[%s1456 + $0x9d0] sm:%s1449]
          %1773 = vst [vmem:[%s1457 + $0x9d0] sm:%s1449] %v1772
          %v1774 = vld [vmem:[%s1456 + $0x9e0] sm:%s1449]
          %1775 = vst [vmem:[%s1457 + $0x9e0] sm:%s1449] %v1774
          %v1776 = vld [vmem:[%s1456 + $0x9f0] sm:%s1449]
          %1777 = vst [vmem:[%s1457 + $0x9f0] sm:%s1449] %v1776
          %v1778 = vld [vmem:[%s1456 + $0xa00] sm:%s1449]
          %1779 = vst [vmem:[%s1457 + $0xa00] sm:%s1449] %v1778
          %v1780 = vld [vmem:[%s1456 + $0xa10] sm:%s1449]
          %1781 = vst [vmem:[%s1457 + $0xa10] sm:%s1449] %v1780
          %v1782 = vld [vmem:[%s1456 + $0xa20] sm:%s1449]
          %1783 = vst [vmem:[%s1457 + $0xa20] sm:%s1449] %v1782
          %v1784 = vld [vmem:[%s1456 + $0xa30] sm:%s1449]
          %1785 = vst [vmem:[%s1457 + $0xa30] sm:%s1449] %v1784
          %v1786 = vld [vmem:[%s1456 + $0xa40] sm:%s1449]
          %1787 = vst [vmem:[%s1457 + $0xa40] sm:%s1449] %v1786
          %v1788 = vld [vmem:[%s1456 + $0xa50] sm:%s1449]
          %1789 = vst [vmem:[%s1457 + $0xa50] sm:%s1449] %v1788
          %v1790 = vld [vmem:[%s1456 + $0xa60] sm:%s1449]
          %1791 = vst [vmem:[%s1457 + $0xa60] sm:%s1449] %v1790
          %v1792 = vld [vmem:[%s1456 + $0xa70] sm:%s1449]
          %1793 = vst [vmem:[%s1457 + $0xa70] sm:%s1449] %v1792
          %v1794 = vld [vmem:[%s1456 + $0xa80] sm:%s1449]
          %1795 = vst [vmem:[%s1457 + $0xa80] sm:%s1449] %v1794
          %v1796 = vld [vmem:[%s1456 + $0xa90] sm:%s1449]
          %1797 = vst [vmem:[%s1457 + $0xa90] sm:%s1449] %v1796
          %v1798 = vld [vmem:[%s1456 + $0xaa0] sm:%s1449]
          %1799 = vst [vmem:[%s1457 + $0xaa0] sm:%s1449] %v1798
          %v1800 = vld [vmem:[%s1456 + $0xab0] sm:%s1449]
          %1801 = vst [vmem:[%s1457 + $0xab0] sm:%s1449] %v1800
          %v1802 = vld [vmem:[%s1456 + $0xac0] sm:%s1449]
          %1803 = vst [vmem:[%s1457 + $0xac0] sm:%s1449] %v1802
          %v1804 = vld [vmem:[%s1456 + $0xad0] sm:%s1449]
          %1805 = vst [vmem:[%s1457 + $0xad0] sm:%s1449] %v1804
          %v1806 = vld [vmem:[%s1456 + $0xae0] sm:%s1449]
          %1807 = vst [vmem:[%s1457 + $0xae0] sm:%s1449] %v1806
          %v1808 = vld [vmem:[%s1456 + $0xaf0] sm:%s1449]
          %1809 = vst [vmem:[%s1457 + $0xaf0] sm:%s1449] %v1808
          %v1810 = vld [vmem:[%s1456 + $0xb00] sm:%s1449]
          %1811 = vst [vmem:[%s1457 + $0xb00] sm:%s1449] %v1810
          %v1812 = vld [vmem:[%s1456 + $0xb10] sm:%s1449]
          %1813 = vst [vmem:[%s1457 + $0xb10] sm:%s1449] %v1812
          %v1814 = vld [vmem:[%s1456 + $0xb20] sm:%s1449]
          %1815 = vst [vmem:[%s1457 + $0xb20] sm:%s1449] %v1814
          %v1816 = vld [vmem:[%s1456 + $0xb30] sm:%s1449]
          %1817 = vst [vmem:[%s1457 + $0xb30] sm:%s1449] %v1816
          %v1818 = vld [vmem:[%s1456 + $0xb40] sm:%s1449]
          %1819 = vst [vmem:[%s1457 + $0xb40] sm:%s1449] %v1818
          %v1820 = vld [vmem:[%s1456 + $0xb50] sm:%s1449]
          %1821 = vst [vmem:[%s1457 + $0xb50] sm:%s1449] %v1820
          %v1822 = vld [vmem:[%s1456 + $0xb60] sm:%s1449]
          %1823 = vst [vmem:[%s1457 + $0xb60] sm:%s1449] %v1822
          %v1824 = vld [vmem:[%s1456 + $0xb70] sm:%s1449]
          %1825 = vst [vmem:[%s1457 + $0xb70] sm:%s1449] %v1824
          %v1826 = vld [vmem:[%s1456 + $0xb80] sm:%s1449]
          %1827 = vst [vmem:[%s1457 + $0xb80] sm:%s1449] %v1826
          %v1828 = vld [vmem:[%s1456 + $0xb90] sm:%s1449]
          %1829 = vst [vmem:[%s1457 + $0xb90] sm:%s1449] %v1828
          %v1830 = vld [vmem:[%s1456 + $0xba0] sm:%s1449]
          %1831 = vst [vmem:[%s1457 + $0xba0] sm:%s1449] %v1830
          %v1832 = vld [vmem:[%s1456 + $0xbb0] sm:%s1449]
          %1833 = vst [vmem:[%s1457 + $0xbb0] sm:%s1449] %v1832
          %v1834 = vld [vmem:[%s1456 + $0xbc0] sm:%s1449]
          %1835 = vst [vmem:[%s1457 + $0xbc0] sm:%s1449] %v1834
          %v1836 = vld [vmem:[%s1456 + $0xbd0] sm:%s1449]
          %1837 = vst [vmem:[%s1457 + $0xbd0] sm:%s1449] %v1836
          %v1838 = vld [vmem:[%s1456 + $0xbe0] sm:%s1449]
          %1839 = vst [vmem:[%s1457 + $0xbe0] sm:%s1449] %v1838
          %v1840 = vld [vmem:[%s1456 + $0xbf0] sm:%s1449]
          %1841 = vst [vmem:[%s1457 + $0xbf0] sm:%s1449] %v1840
          %v1842 = vld [vmem:[%s1456 + $0xc00] sm:%s1449]
          %1843 = vst [vmem:[%s1457 + $0xc00] sm:%s1449] %v1842
          %v1844 = vld [vmem:[%s1456 + $0xc10] sm:%s1449]
          %1845 = vst [vmem:[%s1457 + $0xc10] sm:%s1449] %v1844
          %v1846 = vld [vmem:[%s1456 + $0xc20] sm:%s1449]
          %1847 = vst [vmem:[%s1457 + $0xc20] sm:%s1449] %v1846
          %v1848 = vld [vmem:[%s1456 + $0xc30] sm:%s1449]
          %1849 = vst [vmem:[%s1457 + $0xc30] sm:%s1449] %v1848
          %v1850 = vld [vmem:[%s1456 + $0xc40] sm:%s1449]
          %1851 = vst [vmem:[%s1457 + $0xc40] sm:%s1449] %v1850
          %v1852 = vld [vmem:[%s1456 + $0xc50] sm:%s1449]
          %1853 = vst [vmem:[%s1457 + $0xc50] sm:%s1449] %v1852
          %v1854 = vld [vmem:[%s1456 + $0xc60] sm:%s1449]
          %1855 = vst [vmem:[%s1457 + $0xc60] sm:%s1449] %v1854
          %v1856 = vld [vmem:[%s1456 + $0xc70] sm:%s1449]
          %1857 = vst [vmem:[%s1457 + $0xc70] sm:%s1449] %v1856
          %v1858 = vld [vmem:[%s1456 + $0xc80] sm:%s1449]
          %1859 = vst [vmem:[%s1457 + $0xc80] sm:%s1449] %v1858
          %v1860 = vld [vmem:[%s1456 + $0xc90] sm:%s1449]
          %1861 = vst [vmem:[%s1457 + $0xc90] sm:%s1449] %v1860
          %v1862 = vld [vmem:[%s1456 + $0xca0] sm:%s1449]
          %1863 = vst [vmem:[%s1457 + $0xca0] sm:%s1449] %v1862
          %v1864 = vld [vmem:[%s1456 + $0xcb0] sm:%s1449]
          %1865 = vst [vmem:[%s1457 + $0xcb0] sm:%s1449] %v1864
          %v1866 = vld [vmem:[%s1456 + $0xcc0] sm:%s1449]
          %1867 = vst [vmem:[%s1457 + $0xcc0] sm:%s1449] %v1866
          %v1868 = vld [vmem:[%s1456 + $0xcd0] sm:%s1449]
          %1869 = vst [vmem:[%s1457 + $0xcd0] sm:%s1449] %v1868
          %v1870 = vld [vmem:[%s1456 + $0xce0] sm:%s1449]
          %1871 = vst [vmem:[%s1457 + $0xce0] sm:%s1449] %v1870
          %v1872 = vld [vmem:[%s1456 + $0xcf0] sm:%s1449]
          %1873 = vst [vmem:[%s1457 + $0xcf0] sm:%s1449] %v1872
          %v1874 = vld [vmem:[%s1456 + $0xd00] sm:%s1449]
          %1875 = vst [vmem:[%s1457 + $0xd00] sm:%s1449] %v1874
          %v1876 = vld [vmem:[%s1456 + $0xd10] sm:%s1449]
          %1877 = vst [vmem:[%s1457 + $0xd10] sm:%s1449] %v1876
          %v1878 = vld [vmem:[%s1456 + $0xd20] sm:%s1449]
          %1879 = vst [vmem:[%s1457 + $0xd20] sm:%s1449] %v1878
          %v1880 = vld [vmem:[%s1456 + $0xd30] sm:%s1449]
          %1881 = vst [vmem:[%s1457 + $0xd30] sm:%s1449] %v1880
          %v1882 = vld [vmem:[%s1456 + $0xd40] sm:%s1449]
          %1883 = vst [vmem:[%s1457 + $0xd40] sm:%s1449] %v1882
          %v1884 = vld [vmem:[%s1456 + $0xd50] sm:%s1449]
          %1885 = vst [vmem:[%s1457 + $0xd50] sm:%s1449] %v1884
          %v1886 = vld [vmem:[%s1456 + $0xd60] sm:%s1449]
          %1887 = vst [vmem:[%s1457 + $0xd60] sm:%s1449] %v1886
          %v1888 = vld [vmem:[%s1456 + $0xd70] sm:%s1449]
          %1889 = vst [vmem:[%s1457 + $0xd70] sm:%s1449] %v1888
          %v1890 = vld [vmem:[%s1456 + $0xd80] sm:%s1449]
          %1891 = vst [vmem:[%s1457 + $0xd80] sm:%s1449] %v1890
          %v1892 = vld [vmem:[%s1456 + $0xd90] sm:%s1449]
          %1893 = vst [vmem:[%s1457 + $0xd90] sm:%s1449] %v1892
          %v1894 = vld [vmem:[%s1456 + $0xda0] sm:%s1449]
          %1895 = vst [vmem:[%s1457 + $0xda0] sm:%s1449] %v1894
          %v1896 = vld [vmem:[%s1456 + $0xdb0] sm:%s1449]
          %1897 = vst [vmem:[%s1457 + $0xdb0] sm:%s1449] %v1896
          %v1898 = vld [vmem:[%s1456 + $0xdc0] sm:%s1449]
          %1899 = vst [vmem:[%s1457 + $0xdc0] sm:%s1449] %v1898
          %v1900 = vld [vmem:[%s1456 + $0xdd0] sm:%s1449]
          %1901 = vst [vmem:[%s1457 + $0xdd0] sm:%s1449] %v1900
          %v1902 = vld [vmem:[%s1456 + $0xde0] sm:%s1449]
          %1903 = vst [vmem:[%s1457 + $0xde0] sm:%s1449] %v1902
          %v1904 = vld [vmem:[%s1456 + $0xdf0] sm:%s1449]
          %1905 = vst [vmem:[%s1457 + $0xdf0] sm:%s1449] %v1904
          %v1906 = vld [vmem:[%s1456 + $0xe00] sm:%s1449]
          %1907 = vst [vmem:[%s1457 + $0xe00] sm:%s1449] %v1906
          %v1908 = vld [vmem:[%s1456 + $0xe10] sm:%s1449]
          %1909 = vst [vmem:[%s1457 + $0xe10] sm:%s1449] %v1908
          %v1910 = vld [vmem:[%s1456 + $0xe20] sm:%s1449]
          %1911 = vst [vmem:[%s1457 + $0xe20] sm:%s1449] %v1910
          %v1912 = vld [vmem:[%s1456 + $0xe30] sm:%s1449]
          %1913 = vst [vmem:[%s1457 + $0xe30] sm:%s1449] %v1912
          %v1914 = vld [vmem:[%s1456 + $0xe40] sm:%s1449]
          %1915 = vst [vmem:[%s1457 + $0xe40] sm:%s1449] %v1914
          %v1916 = vld [vmem:[%s1456 + $0xe50] sm:%s1449]
          %1917 = vst [vmem:[%s1457 + $0xe50] sm:%s1449] %v1916
          %v1918 = vld [vmem:[%s1456 + $0xe60] sm:%s1449]
          %1919 = vst [vmem:[%s1457 + $0xe60] sm:%s1449] %v1918
          %v1920 = vld [vmem:[%s1456 + $0xe70] sm:%s1449]
          %1921 = vst [vmem:[%s1457 + $0xe70] sm:%s1449] %v1920
          %v1922 = vld [vmem:[%s1456 + $0xe80] sm:%s1449]
          %1923 = vst [vmem:[%s1457 + $0xe80] sm:%s1449] %v1922
          %v1924 = vld [vmem:[%s1456 + $0xe90] sm:%s1449]
          %1925 = vst [vmem:[%s1457 + $0xe90] sm:%s1449] %v1924
          %v1926 = vld [vmem:[%s1456 + $0xea0] sm:%s1449]
          %1927 = vst [vmem:[%s1457 + $0xea0] sm:%s1449] %v1926
          %v1928 = vld [vmem:[%s1456 + $0xeb0] sm:%s1449]
          %1929 = vst [vmem:[%s1457 + $0xeb0] sm:%s1449] %v1928
          %v1930 = vld [vmem:[%s1456 + $0xec0] sm:%s1449]
          %1931 = vst [vmem:[%s1457 + $0xec0] sm:%s1449] %v1930
          %v1932 = vld [vmem:[%s1456 + $0xed0] sm:%s1449]
          %1933 = vst [vmem:[%s1457 + $0xed0] sm:%s1449] %v1932
          %v1934 = vld [vmem:[%s1456 + $0xee0] sm:%s1449]
          %1935 = vst [vmem:[%s1457 + $0xee0] sm:%s1449] %v1934
          %v1936 = vld [vmem:[%s1456 + $0xef0] sm:%s1449]
          %1937 = vst [vmem:[%s1457 + $0xef0] sm:%s1449] %v1936
          %v1938 = vld [vmem:[%s1456 + $0xf00] sm:%s1449]
          %1939 = vst [vmem:[%s1457 + $0xf00] sm:%s1449] %v1938
          %v1940 = vld [vmem:[%s1456 + $0xf10] sm:%s1449]
          %1941 = vst [vmem:[%s1457 + $0xf10] sm:%s1449] %v1940
          %v1942 = vld [vmem:[%s1456 + $0xf20] sm:%s1449]
          %1943 = vst [vmem:[%s1457 + $0xf20] sm:%s1449] %v1942
          %v1944 = vld [vmem:[%s1456 + $0xf30] sm:%s1449]
          %1945 = vst [vmem:[%s1457 + $0xf30] sm:%s1449] %v1944
          %v1946 = vld [vmem:[%s1456 + $0xf40] sm:%s1449]
          %1947 = vst [vmem:[%s1457 + $0xf40] sm:%s1449] %v1946
          %v1948 = vld [vmem:[%s1456 + $0xf50] sm:%s1449]
          %1949 = vst [vmem:[%s1457 + $0xf50] sm:%s1449] %v1948
          %v1950 = vld [vmem:[%s1456 + $0xf60] sm:%s1449]
          %1951 = vst [vmem:[%s1457 + $0xf60] sm:%s1449] %v1950
          %v1952 = vld [vmem:[%s1456 + $0xf70] sm:%s1449]
          %1953 = vst [vmem:[%s1457 + $0xf70] sm:%s1449] %v1952
          %v1954 = vld [vmem:[%s1456 + $0xf80] sm:%s1449]
          %1955 = vst [vmem:[%s1457 + $0xf80] sm:%s1449] %v1954
          %v1956 = vld [vmem:[%s1456 + $0xf90] sm:%s1449]
          %1957 = vst [vmem:[%s1457 + $0xf90] sm:%s1449] %v1956
          %v1958 = vld [vmem:[%s1456 + $0xfa0] sm:%s1449]
          %1959 = vst [vmem:[%s1457 + $0xfa0] sm:%s1449] %v1958
          %v1960 = vld [vmem:[%s1456 + $0xfb0] sm:%s1449]
          %1961 = vst [vmem:[%s1457 + $0xfb0] sm:%s1449] %v1960
          %v1962 = vld [vmem:[%s1456 + $0xfc0] sm:%s1449]
          %1963 = vst [vmem:[%s1457 + $0xfc0] sm:%s1449] %v1962
          %v1964 = vld [vmem:[%s1456 + $0xfd0] sm:%s1449]
          %1965 = vst [vmem:[%s1457 + $0xfd0] sm:%s1449] %v1964
          %v1966 = vld [vmem:[%s1456 + $0xfe0] sm:%s1449]
          %1967 = vst [vmem:[%s1457 + $0xfe0] sm:%s1449] %v1966
          %v1968 = vld [vmem:[%s1456 + $0xff0] sm:%s1449]
          %1969 = vst [vmem:[%s1457 + $0xff0] sm:%s1449] %v1968
          %v1970 = vld [vmem:[%s1456 + $0x1000] sm:%s1449]
          %1971 = vst [vmem:[%s1457 + $0x1000] sm:%s1449] %v1970
          %v1972 = vld [vmem:[%s1456 + $0x1010] sm:%s1449]
          %1973 = vst [vmem:[%s1457 + $0x1010] sm:%s1449] %v1972
          %v1974 = vld [vmem:[%s1456 + $0x1020] sm:%s1449]
          %1975 = vst [vmem:[%s1457 + $0x1020] sm:%s1449] %v1974
          %v1976 = vld [vmem:[%s1456 + $0x1030] sm:%s1449]
          %1977 = vst [vmem:[%s1457 + $0x1030] sm:%s1449] %v1976
          %v1978 = vld [vmem:[%s1456 + $0x1040] sm:%s1449]
          %1979 = vst [vmem:[%s1457 + $0x1040] sm:%s1449] %v1978
          %v1980 = vld [vmem:[%s1456 + $0x1050] sm:%s1449]
          %1981 = vst [vmem:[%s1457 + $0x1050] sm:%s1449] %v1980
          %v1982 = vld [vmem:[%s1456 + $0x1060] sm:%s1449]
          %1983 = vst [vmem:[%s1457 + $0x1060] sm:%s1449] %v1982
          %v1984 = vld [vmem:[%s1456 + $0x1070] sm:%s1449]
          %1985 = vst [vmem:[%s1457 + $0x1070] sm:%s1449] %v1984
          %v1986 = vld [vmem:[%s1456 + $0x1080] sm:%s1449]
          %1987 = vst [vmem:[%s1457 + $0x1080] sm:%s1449] %v1986
          %v1988 = vld [vmem:[%s1456 + $0x1090] sm:%s1449]
          %1989 = vst [vmem:[%s1457 + $0x1090] sm:%s1449] %v1988
          %v1990 = vld [vmem:[%s1456 + $0x10a0] sm:%s1449]
          %1991 = vst [vmem:[%s1457 + $0x10a0] sm:%s1449] %v1990
          %v1992 = vld [vmem:[%s1456 + $0x10b0] sm:%s1449]
          %1993 = vst [vmem:[%s1457 + $0x10b0] sm:%s1449] %v1992
          %v1994 = vld [vmem:[%s1456 + $0x10c0] sm:%s1449]
          %1995 = vst [vmem:[%s1457 + $0x10c0] sm:%s1449] %v1994
          %v1996 = vld [vmem:[%s1456 + $0x10d0] sm:%s1449]
          %1997 = vst [vmem:[%s1457 + $0x10d0] sm:%s1449] %v1996
          %v1998 = vld [vmem:[%s1456 + $0x10e0] sm:%s1449]
          %1999 = vst [vmem:[%s1457 + $0x10e0] sm:%s1449] %v1998
          %v2000 = vld [vmem:[%s1456 + $0x10f0] sm:%s1449]
          %2001 = vst [vmem:[%s1457 + $0x10f0] sm:%s1449] %v2000
          %v2002 = vld [vmem:[%s1456 + $0x1100] sm:%s1449]
          %2003 = vst [vmem:[%s1457 + $0x1100] sm:%s1449] %v2002
          %v2004 = vld [vmem:[%s1456 + $0x1110] sm:%s1449]
          %2005 = vst [vmem:[%s1457 + $0x1110] sm:%s1449] %v2004
          %v2006 = vld [vmem:[%s1456 + $0x1120] sm:%s1449]
          %2007 = vst [vmem:[%s1457 + $0x1120] sm:%s1449] %v2006
          %v2008 = vld [vmem:[%s1456 + $0x1130] sm:%s1449]
          %2009 = vst [vmem:[%s1457 + $0x1130] sm:%s1449] %v2008
          %v2010 = vld [vmem:[%s1456 + $0x1140] sm:%s1449]
          %2011 = vst [vmem:[%s1457 + $0x1140] sm:%s1449] %v2010
          %v2012 = vld [vmem:[%s1456 + $0x1150] sm:%s1449]
          %2013 = vst [vmem:[%s1457 + $0x1150] sm:%s1449] %v2012
          %v2014 = vld [vmem:[%s1456 + $0x1160] sm:%s1449]
          %2015 = vst [vmem:[%s1457 + $0x1160] sm:%s1449] %v2014
          %v2016 = vld [vmem:[%s1456 + $0x1170] sm:%s1449]
          %2017 = vst [vmem:[%s1457 + $0x1170] sm:%s1449] %v2016
          %v2018 = vld [vmem:[%s1456 + $0x1180] sm:%s1449]
          %2019 = vst [vmem:[%s1457 + $0x1180] sm:%s1449] %v2018
          %v2020 = vld [vmem:[%s1456 + $0x1190] sm:%s1449]
          %2021 = vst [vmem:[%s1457 + $0x1190] sm:%s1449] %v2020
          %v2022 = vld [vmem:[%s1456 + $0x11a0] sm:%s1449]
          %2023 = vst [vmem:[%s1457 + $0x11a0] sm:%s1449] %v2022
          %v2024 = vld [vmem:[%s1456 + $0x11b0] sm:%s1449]
          %2025 = vst [vmem:[%s1457 + $0x11b0] sm:%s1449] %v2024
          %v2026 = vld [vmem:[%s1456 + $0x11c0] sm:%s1449]
          %2027 = vst [vmem:[%s1457 + $0x11c0] sm:%s1449] %v2026
          %v2028 = vld [vmem:[%s1456 + $0x11d0] sm:%s1449]
          %2029 = vst [vmem:[%s1457 + $0x11d0] sm:%s1449] %v2028
          %v2030 = vld [vmem:[%s1456 + $0x11e0] sm:%s1449]
          %2031 = vst [vmem:[%s1457 + $0x11e0] sm:%s1449] %v2030
          %v2032 = vld [vmem:[%s1456 + $0x11f0] sm:%s1449]
          %2033 = vst [vmem:[%s1457 + $0x11f0] sm:%s1449] %v2032
          %v2034 = vld [vmem:[%s1456 + $0x1200] sm:%s1449]
          %2035 = vst [vmem:[%s1457 + $0x1200] sm:%s1449] %v2034
          %v2036 = vld [vmem:[%s1456 + $0x1210] sm:%s1449]
          %2037 = vst [vmem:[%s1457 + $0x1210] sm:%s1449] %v2036
          %v2038 = vld [vmem:[%s1456 + $0x1220] sm:%s1449]
          %2039 = vst [vmem:[%s1457 + $0x1220] sm:%s1449] %v2038
          %v2040 = vld [vmem:[%s1456 + $0x1230] sm:%s1449]
          %2041 = vst [vmem:[%s1457 + $0x1230] sm:%s1449] %v2040
          %v2042 = vld [vmem:[%s1456 + $0x1240] sm:%s1449]
          %2043 = vst [vmem:[%s1457 + $0x1240] sm:%s1449] %v2042
          %v2044 = vld [vmem:[%s1456 + $0x1250] sm:%s1449]
          %2045 = vst [vmem:[%s1457 + $0x1250] sm:%s1449] %v2044
          %v2046 = vld [vmem:[%s1456 + $0x1260] sm:%s1449]
          %2047 = vst [vmem:[%s1457 + $0x1260] sm:%s1449] %v2046
          %v2048 = vld [vmem:[%s1456 + $0x1270] sm:%s1449]
          %2049 = vst [vmem:[%s1457 + $0x1270] sm:%s1449] %v2048
          %v2050 = vld [vmem:[%s1456 + $0x1280] sm:%s1449]
          %2051 = vst [vmem:[%s1457 + $0x1280] sm:%s1449] %v2050
          %v2052 = vld [vmem:[%s1456 + $0x1290] sm:%s1449]
          %2053 = vst [vmem:[%s1457 + $0x1290] sm:%s1449] %v2052
          %v2054 = vld [vmem:[%s1456 + $0x12a0] sm:%s1449]
          %2055 = vst [vmem:[%s1457 + $0x12a0] sm:%s1449] %v2054
          %v2056 = vld [vmem:[%s1456 + $0x12b0] sm:%s1449]
          %2057 = vst [vmem:[%s1457 + $0x12b0] sm:%s1449] %v2056
          %v2058 = vld [vmem:[%s1456 + $0x12c0] sm:%s1449]
          %2059 = vst [vmem:[%s1457 + $0x12c0] sm:%s1449] %v2058
          %v2060 = vld [vmem:[%s1456 + $0x12d0] sm:%s1449]
          %2061 = vst [vmem:[%s1457 + $0x12d0] sm:%s1449] %v2060
          %v2062 = vld [vmem:[%s1456 + $0x12e0] sm:%s1449]
          %2063 = vst [vmem:[%s1457 + $0x12e0] sm:%s1449] %v2062
          %v2064 = vld [vmem:[%s1456 + $0x12f0] sm:%s1449]
          %2065 = vst [vmem:[%s1457 + $0x12f0] sm:%s1449] %v2064
          %v2066 = vld [vmem:[%s1456 + $0x1300] sm:%s1449]
          %2067 = vst [vmem:[%s1457 + $0x1300] sm:%s1449] %v2066
          %v2068 = vld [vmem:[%s1456 + $0x1310] sm:%s1449]
          %2069 = vst [vmem:[%s1457 + $0x1310] sm:%s1449] %v2068
          %v2070 = vld [vmem:[%s1456 + $0x1320] sm:%s1449]
          %2071 = vst [vmem:[%s1457 + $0x1320] sm:%s1449] %v2070
          %v2072 = vld [vmem:[%s1456 + $0x1330] sm:%s1449]
          %2073 = vst [vmem:[%s1457 + $0x1330] sm:%s1449] %v2072
          %v2074 = vld [vmem:[%s1456 + $0x1340] sm:%s1449]
          %2075 = vst [vmem:[%s1457 + $0x1340] sm:%s1449] %v2074
          %v2076 = vld [vmem:[%s1456 + $0x1350] sm:%s1449]
          %2077 = vst [vmem:[%s1457 + $0x1350] sm:%s1449] %v2076
          %v2078 = vld [vmem:[%s1456 + $0x1360] sm:%s1449]
          %2079 = vst [vmem:[%s1457 + $0x1360] sm:%s1449] %v2078
          %v2080 = vld [vmem:[%s1456 + $0x1370] sm:%s1449]
          %2081 = vst [vmem:[%s1457 + $0x1370] sm:%s1449] %v2080
          %v2082 = vld [vmem:[%s1456 + $0x1380] sm:%s1449]
          %2083 = vst [vmem:[%s1457 + $0x1380] sm:%s1449] %v2082
          %v2084 = vld [vmem:[%s1456 + $0x1390] sm:%s1449]
          %2085 = vst [vmem:[%s1457 + $0x1390] sm:%s1449] %v2084
          %v2086 = vld [vmem:[%s1456 + $0x13a0] sm:%s1449]
          %2087 = vst [vmem:[%s1457 + $0x13a0] sm:%s1449] %v2086
          %v2088 = vld [vmem:[%s1456 + $0x13b0] sm:%s1449]
          %2089 = vst [vmem:[%s1457 + $0x13b0] sm:%s1449] %v2088
          %v2090 = vld [vmem:[%s1456 + $0x13c0] sm:%s1449]
          %2091 = vst [vmem:[%s1457 + $0x13c0] sm:%s1449] %v2090
          %v2092 = vld [vmem:[%s1456 + $0x13d0] sm:%s1449]
          %2093 = vst [vmem:[%s1457 + $0x13d0] sm:%s1449] %v2092
          %v2094 = vld [vmem:[%s1456 + $0x13e0] sm:%s1449]
          %2095 = vst [vmem:[%s1457 + $0x13e0] sm:%s1449] %v2094
          %v2096 = vld [vmem:[%s1456 + $0x13f0] sm:%s1449]
          %2097 = vst [vmem:[%s1457 + $0x13f0] sm:%s1449] %v2096
          %v2098 = vld [vmem:[%s1456 + $0x1400] sm:%s1449]
          %2099 = vst [vmem:[%s1457 + $0x1400] sm:%s1449] %v2098
          %v2100 = vld [vmem:[%s1456 + $0x1410] sm:%s1449]
          %2101 = vst [vmem:[%s1457 + $0x1410] sm:%s1449] %v2100
          %v2102 = vld [vmem:[%s1456 + $0x1420] sm:%s1449]
          %2103 = vst [vmem:[%s1457 + $0x1420] sm:%s1449] %v2102
          %v2104 = vld [vmem:[%s1456 + $0x1430] sm:%s1449]
          %2105 = vst [vmem:[%s1457 + $0x1430] sm:%s1449] %v2104
          %v2106 = vld [vmem:[%s1456 + $0x1440] sm:%s1449]
          %2107 = vst [vmem:[%s1457 + $0x1440] sm:%s1449] %v2106
          %v2108 = vld [vmem:[%s1456 + $0x1450] sm:%s1449]
          %2109 = vst [vmem:[%s1457 + $0x1450] sm:%s1449] %v2108
          %v2110 = vld [vmem:[%s1456 + $0x1460] sm:%s1449]
          %2111 = vst [vmem:[%s1457 + $0x1460] sm:%s1449] %v2110
          %v2112 = vld [vmem:[%s1456 + $0x1470] sm:%s1449]
          %2113 = vst [vmem:[%s1457 + $0x1470] sm:%s1449] %v2112
          %v2114 = vld [vmem:[%s1456 + $0x1480] sm:%s1449]
          %2115 = vst [vmem:[%s1457 + $0x1480] sm:%s1449] %v2114
          %v2116 = vld [vmem:[%s1456 + $0x1490] sm:%s1449]
          %2117 = vst [vmem:[%s1457 + $0x1490] sm:%s1449] %v2116
          %v2118 = vld [vmem:[%s1456 + $0x14a0] sm:%s1449]
          %2119 = vst [vmem:[%s1457 + $0x14a0] sm:%s1449] %v2118
          %v2120 = vld [vmem:[%s1456 + $0x14b0] sm:%s1449]
          %2121 = vst [vmem:[%s1457 + $0x14b0] sm:%s1449] %v2120
          %v2122 = vld [vmem:[%s1456 + $0x14c0] sm:%s1449]
          %2123 = vst [vmem:[%s1457 + $0x14c0] sm:%s1449] %v2122
          %v2124 = vld [vmem:[%s1456 + $0x14d0] sm:%s1449]
          %2125 = vst [vmem:[%s1457 + $0x14d0] sm:%s1449] %v2124
          %v2126 = vld [vmem:[%s1456 + $0x14e0] sm:%s1449]
          %2127 = vst [vmem:[%s1457 + $0x14e0] sm:%s1449] %v2126
          %v2128 = vld [vmem:[%s1456 + $0x14f0] sm:%s1449]
          %2129 = vst [vmem:[%s1457 + $0x14f0] sm:%s1449] %v2128
          %v2130 = vld [vmem:[%s1456 + $0x1500] sm:%s1449]
          %2131 = vst [vmem:[%s1457 + $0x1500] sm:%s1449] %v2130
          %v2132 = vld [vmem:[%s1456 + $0x1510] sm:%s1449]
          %2133 = vst [vmem:[%s1457 + $0x1510] sm:%s1449] %v2132
          %v2134 = vld [vmem:[%s1456 + $0x1520] sm:%s1449]
          %2135 = vst [vmem:[%s1457 + $0x1520] sm:%s1449] %v2134
          %v2136 = vld [vmem:[%s1456 + $0x1530] sm:%s1449]
          %2137 = vst [vmem:[%s1457 + $0x1530] sm:%s1449] %v2136
          %v2138 = vld [vmem:[%s1456 + $0x1540] sm:%s1449]
          %2139 = vst [vmem:[%s1457 + $0x1540] sm:%s1449] %v2138
          %v2140 = vld [vmem:[%s1456 + $0x1550] sm:%s1449]
          %2141 = vst [vmem:[%s1457 + $0x1550] sm:%s1449] %v2140
          %v2142 = vld [vmem:[%s1456 + $0x1560] sm:%s1449]
          %2143 = vst [vmem:[%s1457 + $0x1560] sm:%s1449] %v2142
          %v2144 = vld [vmem:[%s1456 + $0x1570] sm:%s1449]
          %2145 = vst [vmem:[%s1457 + $0x1570] sm:%s1449] %v2144
          %v2146 = vld [vmem:[%s1456 + $0x1580] sm:%s1449]
          %2147 = vst [vmem:[%s1457 + $0x1580] sm:%s1449] %v2146
          %v2148 = vld [vmem:[%s1456 + $0x1590] sm:%s1449]
          %2149 = vst [vmem:[%s1457 + $0x1590] sm:%s1449] %v2148
          %v2150 = vld [vmem:[%s1456 + $0x15a0] sm:%s1449]
          %2151 = vst [vmem:[%s1457 + $0x15a0] sm:%s1449] %v2150
          %v2152 = vld [vmem:[%s1456 + $0x15b0] sm:%s1449]
          %2153 = vst [vmem:[%s1457 + $0x15b0] sm:%s1449] %v2152
          %v2154 = vld [vmem:[%s1456 + $0x15c0] sm:%s1449]
          %2155 = vst [vmem:[%s1457 + $0x15c0] sm:%s1449] %v2154
          %v2156 = vld [vmem:[%s1456 + $0x15d0] sm:%s1449]
          %2157 = vst [vmem:[%s1457 + $0x15d0] sm:%s1449] %v2156
          %v2158 = vld [vmem:[%s1456 + $0x15e0] sm:%s1449]
          %2159 = vst [vmem:[%s1457 + $0x15e0] sm:%s1449] %v2158
          %v2160 = vld [vmem:[%s1456 + $0x15f0] sm:%s1449]
          %2161 = vst [vmem:[%s1457 + $0x15f0] sm:%s1449] %v2160
        $region33: #{tpu_custom_call.1} parent=20 // loop_footer
          %s1455 = sadd.s32 1, %s1451
        $region34: #{tpu_custom_call.1} parent=20 // loop_footer_branch
          %1450 = sbr.rel target = $region30
        $region35: #{tpu_custom_call.1} parent=20 // loop_exit
          _
      $region21: #{tpu_custom_call.1} parent=5 // pred_fallthru
        _
    $region6: #{tpu_custom_call.1} parent=2 // pred_fallthru
      _
    // Predicated region
    $region7: #{tpu_custom_call.1} parent=2 // pred_check
      %p11 = pneg %p7
    $region8: #{tpu_custom_call.1} parent=2 // pred_check_branch
      %13 = sbr.rel (%p11) target = $region10
    $region9: #{tpu_custom_call.1} parent=2 // pred_region
      %s14 = sshllo.u32 0, 14
      loop: start=0, step=1, limit=1
      $region11: #{tpu_custom_call.1} parent=9 // loop_pre_header
        _
      $region12: #{tpu_custom_call.1} parent=9 // loop_header
        %s16 = sphi 0, %s20
        %p17 = scmp.ge.s32.totalorder %s16, 1
        %s21 = sphi %s0, %s0
        %s22 = sphi %s1, %s1
      $region13: #{tpu_custom_call.1} parent=9 // loop_header_branch
        %19 = sbr.rel (%p17) target = $region17
      $region14: #{tpu_custom_call.1} parent=9 // loop_body
        %v23 = vld [vmem:[%s21] sm:%s14]
        %24 = vst [vmem:[%s22] sm:%s14] %v23
        %v25 = vld [vmem:[%s21 + $0x10] sm:%s14]
        %26 = vst [vmem:[%s22 + $0x10] sm:%s14] %v25
        %v27 = vld [vmem:[%s21 + $0x20] sm:%s14]
        %28 = vst [vmem:[%s22 + $0x20] sm:%s14] %v27
        %v29 = vld [vmem:[%s21 + $0x30] sm:%s14]
        %30 = vst [vmem:[%s22 + $0x30] sm:%s14] %v29
        %v31 = vld [vmem:[%s21 + $0x40] sm:%s14]
        %32 = vst [vmem:[%s22 + $0x40] sm:%s14] %v31
        %v33 = vld [vmem:[%s21 + $0x50] sm:%s14]
        %34 = vst [vmem:[%s22 + $0x50] sm:%s14] %v33
        %v35 = vld [vmem:[%s21 + $0x60] sm:%s14]
        %36 = vst [vmem:[%s22 + $0x60] sm:%s14] %v35
        %v37 = vld [vmem:[%s21 + $0x70] sm:%s14]
        %38 = vst [vmem:[%s22 + $0x70] sm:%s14] %v37
        %v39 = vld [vmem:[%s21 + $0x80] sm:%s14]
        %40 = vst [vmem:[%s22 + $0x80] sm:%s14] %v39
        %v41 = vld [vmem:[%s21 + $0x90] sm:%s14]
        %42 = vst [vmem:[%s22 + $0x90] sm:%s14] %v41
        %v43 = vld [vmem:[%s21 + $0xa0] sm:%s14]
        %44 = vst [vmem:[%s22 + $0xa0] sm:%s14] %v43
        %v45 = vld [vmem:[%s21 + $0xb0] sm:%s14]
        %46 = vst [vmem:[%s22 + $0xb0] sm:%s14] %v45
        %v47 = vld [vmem:[%s21 + $0xc0] sm:%s14]
        %48 = vst [vmem:[%s22 + $0xc0] sm:%s14] %v47
        %v49 = vld [vmem:[%s21 + $0xd0] sm:%s14]
        %50 = vst [vmem:[%s22 + $0xd0] sm:%s14] %v49
        %v51 = vld [vmem:[%s21 + $0xe0] sm:%s14]
        %52 = vst [vmem:[%s22 + $0xe0] sm:%s14] %v51
        %v53 = vld [vmem:[%s21 + $0xf0] sm:%s14]
        %54 = vst [vmem:[%s22 + $0xf0] sm:%s14] %v53
        %v55 = vld [vmem:[%s21 + $0x100] sm:%s14]
        %56 = vst [vmem:[%s22 + $0x100] sm:%s14] %v55
        %v57 = vld [vmem:[%s21 + $0x110] sm:%s14]
        %58 = vst [vmem:[%s22 + $0x110] sm:%s14] %v57
        %v59 = vld [vmem:[%s21 + $0x120] sm:%s14]
        %60 = vst [vmem:[%s22 + $0x120] sm:%s14] %v59
        %v61 = vld [vmem:[%s21 + $0x130] sm:%s14]
        %62 = vst [vmem:[%s22 + $0x130] sm:%s14] %v61
        %v63 = vld [vmem:[%s21 + $0x140] sm:%s14]
        %64 = vst [vmem:[%s22 + $0x140] sm:%s14] %v63
        %v65 = vld [vmem:[%s21 + $0x150] sm:%s14]
        %66 = vst [vmem:[%s22 + $0x150] sm:%s14] %v65
        %v67 = vld [vmem:[%s21 + $0x160] sm:%s14]
        %68 = vst [vmem:[%s22 + $0x160] sm:%s14] %v67
        %v69 = vld [vmem:[%s21 + $0x170] sm:%s14]
        %70 = vst [vmem:[%s22 + $0x170] sm:%s14] %v69
        %v71 = vld [vmem:[%s21 + $0x180] sm:%s14]
        %72 = vst [vmem:[%s22 + $0x180] sm:%s14] %v71
        %v73 = vld [vmem:[%s21 + $0x190] sm:%s14]
        %74 = vst [vmem:[%s22 + $0x190] sm:%s14] %v73
        %v75 = vld [vmem:[%s21 + $0x1a0] sm:%s14]
        %76 = vst [vmem:[%s22 + $0x1a0] sm:%s14] %v75
        %v77 = vld [vmem:[%s21 + $0x1b0] sm:%s14]
        %78 = vst [vmem:[%s22 + $0x1b0] sm:%s14] %v77
        %v79 = vld [vmem:[%s21 + $0x1c0] sm:%s14]
        %80 = vst [vmem:[%s22 + $0x1c0] sm:%s14] %v79
        %v81 = vld [vmem:[%s21 + $0x1d0] sm:%s14]
        %82 = vst [vmem:[%s22 + $0x1d0] sm:%s14] %v81
        %v83 = vld [vmem:[%s21 + $0x1e0] sm:%s14]
        %84 = vst [vmem:[%s22 + $0x1e0] sm:%s14] %v83
        %v85 = vld [vmem:[%s21 + $0x1f0] sm:%s14]
        %86 = vst [vmem:[%s22 + $0x1f0] sm:%s14] %v85
        %v87 = vld [vmem:[%s21 + $0x200] sm:%s14]
        %88 = vst [vmem:[%s22 + $0x200] sm:%s14] %v87
        %v89 = vld [vmem:[%s21 + $0x210] sm:%s14]
        %90 = vst [vmem:[%s22 + $0x210] sm:%s14] %v89
        %v91 = vld [vmem:[%s21 + $0x220] sm:%s14]
        %92 = vst [vmem:[%s22 + $0x220] sm:%s14] %v91
        %v93 = vld [vmem:[%s21 + $0x230] sm:%s14]
        %94 = vst [vmem:[%s22 + $0x230] sm:%s14] %v93
        %v95 = vld [vmem:[%s21 + $0x240] sm:%s14]
        %96 = vst [vmem:[%s22 + $0x240] sm:%s14] %v95
        %v97 = vld [vmem:[%s21 + $0x250] sm:%s14]
        %98 = vst [vmem:[%s22 + $0x250] sm:%s14] %v97
        %v99 = vld [vmem:[%s21 + $0x260] sm:%s14]
        %100 = vst [vmem:[%s22 + $0x260] sm:%s14] %v99
        %v101 = vld [vmem:[%s21 + $0x270] sm:%s14]
        %102 = vst [vmem:[%s22 + $0x270] sm:%s14] %v101
        %v103 = vld [vmem:[%s21 + $0x280] sm:%s14]
        %104 = vst [vmem:[%s22 + $0x280] sm:%s14] %v103
        %v105 = vld [vmem:[%s21 + $0x290] sm:%s14]
        %106 = vst [vmem:[%s22 + $0x290] sm:%s14] %v105
        %v107 = vld [vmem:[%s21 + $0x2a0] sm:%s14]
        %108 = vst [vmem:[%s22 + $0x2a0] sm:%s14] %v107
        %v109 = vld [vmem:[%s21 + $0x2b0] sm:%s14]
        %110 = vst [vmem:[%s22 + $0x2b0] sm:%s14] %v109
        %v111 = vld [vmem:[%s21 + $0x2c0] sm:%s14]
        %112 = vst [vmem:[%s22 + $0x2c0] sm:%s14] %v111
        %v113 = vld [vmem:[%s21 + $0x2d0] sm:%s14]
        %114 = vst [vmem:[%s22 + $0x2d0] sm:%s14] %v113
        %v115 = vld [vmem:[%s21 + $0x2e0] sm:%s14]
        %116 = vst [vmem:[%s22 + $0x2e0] sm:%s14] %v115
        %v117 = vld [vmem:[%s21 + $0x2f0] sm:%s14]
        %118 = vst [vmem:[%s22 + $0x2f0] sm:%s14] %v117
        %v119 = vld [vmem:[%s21 + $0x300] sm:%s14]
        %120 = vst [vmem:[%s22 + $0x300] sm:%s14] %v119
        %v121 = vld [vmem:[%s21 + $0x310] sm:%s14]
        %122 = vst [vmem:[%s22 + $0x310] sm:%s14] %v121
        %v123 = vld [vmem:[%s21 + $0x320] sm:%s14]
        %124 = vst [vmem:[%s22 + $0x320] sm:%s14] %v123
        %v125 = vld [vmem:[%s21 + $0x330] sm:%s14]
        %126 = vst [vmem:[%s22 + $0x330] sm:%s14] %v125
        %v127 = vld [vmem:[%s21 + $0x340] sm:%s14]
        %128 = vst [vmem:[%s22 + $0x340] sm:%s14] %v127
        %v129 = vld [vmem:[%s21 + $0x350] sm:%s14]
        %130 = vst [vmem:[%s22 + $0x350] sm:%s14] %v129
        %v131 = vld [vmem:[%s21 + $0x360] sm:%s14]
        %132 = vst [vmem:[%s22 + $0x360] sm:%s14] %v131
        %v133 = vld [vmem:[%s21 + $0x370] sm:%s14]
        %134 = vst [vmem:[%s22 + $0x370] sm:%s14] %v133
        %v135 = vld [vmem:[%s21 + $0x380] sm:%s14]
        %136 = vst [vmem:[%s22 + $0x380] sm:%s14] %v135
        %v137 = vld [vmem:[%s21 + $0x390] sm:%s14]
        %138 = vst [vmem:[%s22 + $0x390] sm:%s14] %v137
        %v139 = vld [vmem:[%s21 + $0x3a0] sm:%s14]
        %140 = vst [vmem:[%s22 + $0x3a0] sm:%s14] %v139
        %v141 = vld [vmem:[%s21 + $0x3b0] sm:%s14]
        %142 = vst [vmem:[%s22 + $0x3b0] sm:%s14] %v141
        %v143 = vld [vmem:[%s21 + $0x3c0] sm:%s14]
        %144 = vst [vmem:[%s22 + $0x3c0] sm:%s14] %v143
        %v145 = vld [vmem:[%s21 + $0x3d0] sm:%s14]
        %146 = vst [vmem:[%s22 + $0x3d0] sm:%s14] %v145
        %v147 = vld [vmem:[%s21 + $0x3e0] sm:%s14]
        %148 = vst [vmem:[%s22 + $0x3e0] sm:%s14] %v147
        %v149 = vld [vmem:[%s21 + $0x3f0] sm:%s14]
        %150 = vst [vmem:[%s22 + $0x3f0] sm:%s14] %v149
        %v151 = vld [vmem:[%s21 + $0x400] sm:%s14]
        %152 = vst [vmem:[%s22 + $0x400] sm:%s14] %v151
        %v153 = vld [vmem:[%s21 + $0x410] sm:%s14]
        %154 = vst [vmem:[%s22 + $0x410] sm:%s14] %v153
        %v155 = vld [vmem:[%s21 + $0x420] sm:%s14]
        %156 = vst [vmem:[%s22 + $0x420] sm:%s14] %v155
        %v157 = vld [vmem:[%s21 + $0x430] sm:%s14]
        %158 = vst [vmem:[%s22 + $0x430] sm:%s14] %v157
        %v159 = vld [vmem:[%s21 + $0x440] sm:%s14]
        %160 = vst [vmem:[%s22 + $0x440] sm:%s14] %v159
        %v161 = vld [vmem:[%s21 + $0x450] sm:%s14]
        %162 = vst [vmem:[%s22 + $0x450] sm:%s14] %v161
        %v163 = vld [vmem:[%s21 + $0x460] sm:%s14]
        %164 = vst [vmem:[%s22 + $0x460] sm:%s14] %v163
        %v165 = vld [vmem:[%s21 + $0x470] sm:%s14]
        %166 = vst [vmem:[%s22 + $0x470] sm:%s14] %v165
        %v167 = vld [vmem:[%s21 + $0x480] sm:%s14]
        %168 = vst [vmem:[%s22 + $0x480] sm:%s14] %v167
        %v169 = vld [vmem:[%s21 + $0x490] sm:%s14]
        %170 = vst [vmem:[%s22 + $0x490] sm:%s14] %v169
        %v171 = vld [vmem:[%s21 + $0x4a0] sm:%s14]
        %172 = vst [vmem:[%s22 + $0x4a0] sm:%s14] %v171
        %v173 = vld [vmem:[%s21 + $0x4b0] sm:%s14]
        %174 = vst [vmem:[%s22 + $0x4b0] sm:%s14] %v173
        %v175 = vld [vmem:[%s21 + $0x4c0] sm:%s14]
        %176 = vst [vmem:[%s22 + $0x4c0] sm:%s14] %v175
        %v177 = vld [vmem:[%s21 + $0x4d0] sm:%s14]
        %178 = vst [vmem:[%s22 + $0x4d0] sm:%s14] %v177
        %v179 = vld [vmem:[%s21 + $0x4e0] sm:%s14]
        %180 = vst [vmem:[%s22 + $0x4e0] sm:%s14] %v179
        %v181 = vld [vmem:[%s21 + $0x4f0] sm:%s14]
        %182 = vst [vmem:[%s22 + $0x4f0] sm:%s14] %v181
        %v183 = vld [vmem:[%s21 + $0x500] sm:%s14]
        %184 = vst [vmem:[%s22 + $0x500] sm:%s14] %v183
        %v185 = vld [vmem:[%s21 + $0x510] sm:%s14]
        %186 = vst [vmem:[%s22 + $0x510] sm:%s14] %v185
        %v187 = vld [vmem:[%s21 + $0x520] sm:%s14]
        %188 = vst [vmem:[%s22 + $0x520] sm:%s14] %v187
        %v189 = vld [vmem:[%s21 + $0x530] sm:%s14]
        %190 = vst [vmem:[%s22 + $0x530] sm:%s14] %v189
        %v191 = vld [vmem:[%s21 + $0x540] sm:%s14]
        %192 = vst [vmem:[%s22 + $0x540] sm:%s14] %v191
        %v193 = vld [vmem:[%s21 + $0x550] sm:%s14]
        %194 = vst [vmem:[%s22 + $0x550] sm:%s14] %v193
        %v195 = vld [vmem:[%s21 + $0x560] sm:%s14]
        %196 = vst [vmem:[%s22 + $0x560] sm:%s14] %v195
        %v197 = vld [vmem:[%s21 + $0x570] sm:%s14]
        %198 = vst [vmem:[%s22 + $0x570] sm:%s14] %v197
        %v199 = vld [vmem:[%s21 + $0x580] sm:%s14]
        %200 = vst [vmem:[%s22 + $0x580] sm:%s14] %v199
        %v201 = vld [vmem:[%s21 + $0x590] sm:%s14]
        %202 = vst [vmem:[%s22 + $0x590] sm:%s14] %v201
        %v203 = vld [vmem:[%s21 + $0x5a0] sm:%s14]
        %204 = vst [vmem:[%s22 + $0x5a0] sm:%s14] %v203
        %v205 = vld [vmem:[%s21 + $0x5b0] sm:%s14]
        %206 = vst [vmem:[%s22 + $0x5b0] sm:%s14] %v205
        %v207 = vld [vmem:[%s21 + $0x5c0] sm:%s14]
        %208 = vst [vmem:[%s22 + $0x5c0] sm:%s14] %v207
        %v209 = vld [vmem:[%s21 + $0x5d0] sm:%s14]
        %210 = vst [vmem:[%s22 + $0x5d0] sm:%s14] %v209
        %v211 = vld [vmem:[%s21 + $0x5e0] sm:%s14]
        %212 = vst [vmem:[%s22 + $0x5e0] sm:%s14] %v211
        %v213 = vld [vmem:[%s21 + $0x5f0] sm:%s14]
        %214 = vst [vmem:[%s22 + $0x5f0] sm:%s14] %v213
        %v215 = vld [vmem:[%s21 + $0x600] sm:%s14]
        %216 = vst [vmem:[%s22 + $0x600] sm:%s14] %v215
        %v217 = vld [vmem:[%s21 + $0x610] sm:%s14]
        %218 = vst [vmem:[%s22 + $0x610] sm:%s14] %v217
        %v219 = vld [vmem:[%s21 + $0x620] sm:%s14]
        %220 = vst [vmem:[%s22 + $0x620] sm:%s14] %v219
        %v221 = vld [vmem:[%s21 + $0x630] sm:%s14]
        %222 = vst [vmem:[%s22 + $0x630] sm:%s14] %v221
        %v223 = vld [vmem:[%s21 + $0x640] sm:%s14]
        %224 = vst [vmem:[%s22 + $0x640] sm:%s14] %v223
        %v225 = vld [vmem:[%s21 + $0x650] sm:%s14]
        %226 = vst [vmem:[%s22 + $0x650] sm:%s14] %v225
        %v227 = vld [vmem:[%s21 + $0x660] sm:%s14]
        %228 = vst [vmem:[%s22 + $0x660] sm:%s14] %v227
        %v229 = vld [vmem:[%s21 + $0x670] sm:%s14]
        %230 = vst [vmem:[%s22 + $0x670] sm:%s14] %v229
        %v231 = vld [vmem:[%s21 + $0x680] sm:%s14]
        %232 = vst [vmem:[%s22 + $0x680] sm:%s14] %v231
        %v233 = vld [vmem:[%s21 + $0x690] sm:%s14]
        %234 = vst [vmem:[%s22 + $0x690] sm:%s14] %v233
        %v235 = vld [vmem:[%s21 + $0x6a0] sm:%s14]
        %236 = vst [vmem:[%s22 + $0x6a0] sm:%s14] %v235
        %v237 = vld [vmem:[%s21 + $0x6b0] sm:%s14]
        %238 = vst [vmem:[%s22 + $0x6b0] sm:%s14] %v237
        %v239 = vld [vmem:[%s21 + $0x6c0] sm:%s14]
        %240 = vst [vmem:[%s22 + $0x6c0] sm:%s14] %v239
        %v241 = vld [vmem:[%s21 + $0x6d0] sm:%s14]
        %242 = vst [vmem:[%s22 + $0x6d0] sm:%s14] %v241
        %v243 = vld [vmem:[%s21 + $0x6e0] sm:%s14]
        %244 = vst [vmem:[%s22 + $0x6e0] sm:%s14] %v243
        %v245 = vld [vmem:[%s21 + $0x6f0] sm:%s14]
        %246 = vst [vmem:[%s22 + $0x6f0] sm:%s14] %v245
        %v247 = vld [vmem:[%s21 + $0x700] sm:%s14]
        %248 = vst [vmem:[%s22 + $0x700] sm:%s14] %v247
        %v249 = vld [vmem:[%s21 + $0x710] sm:%s14]
        %250 = vst [vmem:[%s22 + $0x710] sm:%s14] %v249
        %v251 = vld [vmem:[%s21 + $0x720] sm:%s14]
        %252 = vst [vmem:[%s22 + $0x720] sm:%s14] %v251
        %v253 = vld [vmem:[%s21 + $0x730] sm:%s14]
        %254 = vst [vmem:[%s22 + $0x730] sm:%s14] %v253
        %v255 = vld [vmem:[%s21 + $0x740] sm:%s14]
        %256 = vst [vmem:[%s22 + $0x740] sm:%s14] %v255
        %v257 = vld [vmem:[%s21 + $0x750] sm:%s14]
        %258 = vst [vmem:[%s22 + $0x750] sm:%s14] %v257
        %v259 = vld [vmem:[%s21 + $0x760] sm:%s14]
        %260 = vst [vmem:[%s22 + $0x760] sm:%s14] %v259
        %v261 = vld [vmem:[%s21 + $0x770] sm:%s14]
        %262 = vst [vmem:[%s22 + $0x770] sm:%s14] %v261
        %v263 = vld [vmem:[%s21 + $0x780] sm:%s14]
        %264 = vst [vmem:[%s22 + $0x780] sm:%s14] %v263
        %v265 = vld [vmem:[%s21 + $0x790] sm:%s14]
        %266 = vst [vmem:[%s22 + $0x790] sm:%s14] %v265
        %v267 = vld [vmem:[%s21 + $0x7a0] sm:%s14]
        %268 = vst [vmem:[%s22 + $0x7a0] sm:%s14] %v267
        %v269 = vld [vmem:[%s21 + $0x7b0] sm:%s14]
        %270 = vst [vmem:[%s22 + $0x7b0] sm:%s14] %v269
        %v271 = vld [vmem:[%s21 + $0x7c0] sm:%s14]
        %272 = vst [vmem:[%s22 + $0x7c0] sm:%s14] %v271
        %v273 = vld [vmem:[%s21 + $0x7d0] sm:%s14]
        %274 = vst [vmem:[%s22 + $0x7d0] sm:%s14] %v273
        %v275 = vld [vmem:[%s21 + $0x7e0] sm:%s14]
        %276 = vst [vmem:[%s22 + $0x7e0] sm:%s14] %v275
        %v277 = vld [vmem:[%s21 + $0x7f0] sm:%s14]
        %278 = vst [vmem:[%s22 + $0x7f0] sm:%s14] %v277
        %v279 = vld [vmem:[%s21 + $0x800] sm:%s14]
        %280 = vst [vmem:[%s22 + $0x800] sm:%s14] %v279
        %v281 = vld [vmem:[%s21 + $0x810] sm:%s14]
        %282 = vst [vmem:[%s22 + $0x810] sm:%s14] %v281
        %v283 = vld [vmem:[%s21 + $0x820] sm:%s14]
        %284 = vst [vmem:[%s22 + $0x820] sm:%s14] %v283
        %v285 = vld [vmem:[%s21 + $0x830] sm:%s14]
        %286 = vst [vmem:[%s22 + $0x830] sm:%s14] %v285
        %v287 = vld [vmem:[%s21 + $0x840] sm:%s14]
        %288 = vst [vmem:[%s22 + $0x840] sm:%s14] %v287
        %v289 = vld [vmem:[%s21 + $0x850] sm:%s14]
        %290 = vst [vmem:[%s22 + $0x850] sm:%s14] %v289
        %v291 = vld [vmem:[%s21 + $0x860] sm:%s14]
        %292 = vst [vmem:[%s22 + $0x860] sm:%s14] %v291
        %v293 = vld [vmem:[%s21 + $0x870] sm:%s14]
        %294 = vst [vmem:[%s22 + $0x870] sm:%s14] %v293
        %v295 = vld [vmem:[%s21 + $0x880] sm:%s14]
        %296 = vst [vmem:[%s22 + $0x880] sm:%s14] %v295
        %v297 = vld [vmem:[%s21 + $0x890] sm:%s14]
        %298 = vst [vmem:[%s22 + $0x890] sm:%s14] %v297
        %v299 = vld [vmem:[%s21 + $0x8a0] sm:%s14]
        %300 = vst [vmem:[%s22 + $0x8a0] sm:%s14] %v299
        %v301 = vld [vmem:[%s21 + $0x8b0] sm:%s14]
        %302 = vst [vmem:[%s22 + $0x8b0] sm:%s14] %v301
        %v303 = vld [vmem:[%s21 + $0x8c0] sm:%s14]
        %304 = vst [vmem:[%s22 + $0x8c0] sm:%s14] %v303
        %v305 = vld [vmem:[%s21 + $0x8d0] sm:%s14]
        %306 = vst [vmem:[%s22 + $0x8d0] sm:%s14] %v305
        %v307 = vld [vmem:[%s21 + $0x8e0] sm:%s14]
        %308 = vst [vmem:[%s22 + $0x8e0] sm:%s14] %v307
        %v309 = vld [vmem:[%s21 + $0x8f0] sm:%s14]
        %310 = vst [vmem:[%s22 + $0x8f0] sm:%s14] %v309
        %v311 = vld [vmem:[%s21 + $0x900] sm:%s14]
        %312 = vst [vmem:[%s22 + $0x900] sm:%s14] %v311
        %v313 = vld [vmem:[%s21 + $0x910] sm:%s14]
        %314 = vst [vmem:[%s22 + $0x910] sm:%s14] %v313
        %v315 = vld [vmem:[%s21 + $0x920] sm:%s14]
        %316 = vst [vmem:[%s22 + $0x920] sm:%s14] %v315
        %v317 = vld [vmem:[%s21 + $0x930] sm:%s14]
        %318 = vst [vmem:[%s22 + $0x930] sm:%s14] %v317
        %v319 = vld [vmem:[%s21 + $0x940] sm:%s14]
        %320 = vst [vmem:[%s22 + $0x940] sm:%s14] %v319
        %v321 = vld [vmem:[%s21 + $0x950] sm:%s14]
        %322 = vst [vmem:[%s22 + $0x950] sm:%s14] %v321
        %v323 = vld [vmem:[%s21 + $0x960] sm:%s14]
        %324 = vst [vmem:[%s22 + $0x960] sm:%s14] %v323
        %v325 = vld [vmem:[%s21 + $0x970] sm:%s14]
        %326 = vst [vmem:[%s22 + $0x970] sm:%s14] %v325
        %v327 = vld [vmem:[%s21 + $0x980] sm:%s14]
        %328 = vst [vmem:[%s22 + $0x980] sm:%s14] %v327
        %v329 = vld [vmem:[%s21 + $0x990] sm:%s14]
        %330 = vst [vmem:[%s22 + $0x990] sm:%s14] %v329
        %v331 = vld [vmem:[%s21 + $0x9a0] sm:%s14]
        %332 = vst [vmem:[%s22 + $0x9a0] sm:%s14] %v331
        %v333 = vld [vmem:[%s21 + $0x9b0] sm:%s14]
        %334 = vst [vmem:[%s22 + $0x9b0] sm:%s14] %v333
        %v335 = vld [vmem:[%s21 + $0x9c0] sm:%s14]
        %336 = vst [vmem:[%s22 + $0x9c0] sm:%s14] %v335
        %v337 = vld [vmem:[%s21 + $0x9d0] sm:%s14]
        %338 = vst [vmem:[%s22 + $0x9d0] sm:%s14] %v337
        %v339 = vld [vmem:[%s21 + $0x9e0] sm:%s14]
        %340 = vst [vmem:[%s22 + $0x9e0] sm:%s14] %v339
        %v341 = vld [vmem:[%s21 + $0x9f0] sm:%s14]
        %342 = vst [vmem:[%s22 + $0x9f0] sm:%s14] %v341
        %v343 = vld [vmem:[%s21 + $0xa00] sm:%s14]
        %344 = vst [vmem:[%s22 + $0xa00] sm:%s14] %v343
        %v345 = vld [vmem:[%s21 + $0xa10] sm:%s14]
        %346 = vst [vmem:[%s22 + $0xa10] sm:%s14] %v345
        %v347 = vld [vmem:[%s21 + $0xa20] sm:%s14]
        %348 = vst [vmem:[%s22 + $0xa20] sm:%s14] %v347
        %v349 = vld [vmem:[%s21 + $0xa30] sm:%s14]
        %350 = vst [vmem:[%s22 + $0xa30] sm:%s14] %v349
        %v351 = vld [vmem:[%s21 + $0xa40] sm:%s14]
        %352 = vst [vmem:[%s22 + $0xa40] sm:%s14] %v351
        %v353 = vld [vmem:[%s21 + $0xa50] sm:%s14]
        %354 = vst [vmem:[%s22 + $0xa50] sm:%s14] %v353
        %v355 = vld [vmem:[%s21 + $0xa60] sm:%s14]
        %356 = vst [vmem:[%s22 + $0xa60] sm:%s14] %v355
        %v357 = vld [vmem:[%s21 + $0xa70] sm:%s14]
        %358 = vst [vmem:[%s22 + $0xa70] sm:%s14] %v357
        %v359 = vld [vmem:[%s21 + $0xa80] sm:%s14]
        %360 = vst [vmem:[%s22 + $0xa80] sm:%s14] %v359
        %v361 = vld [vmem:[%s21 + $0xa90] sm:%s14]
        %362 = vst [vmem:[%s22 + $0xa90] sm:%s14] %v361
        %v363 = vld [vmem:[%s21 + $0xaa0] sm:%s14]
        %364 = vst [vmem:[%s22 + $0xaa0] sm:%s14] %v363
        %v365 = vld [vmem:[%s21 + $0xab0] sm:%s14]
        %366 = vst [vmem:[%s22 + $0xab0] sm:%s14] %v365
        %v367 = vld [vmem:[%s21 + $0xac0] sm:%s14]
        %368 = vst [vmem:[%s22 + $0xac0] sm:%s14] %v367
        %v369 = vld [vmem:[%s21 + $0xad0] sm:%s14]
        %370 = vst [vmem:[%s22 + $0xad0] sm:%s14] %v369
        %v371 = vld [vmem:[%s21 + $0xae0] sm:%s14]
        %372 = vst [vmem:[%s22 + $0xae0] sm:%s14] %v371
        %v373 = vld [vmem:[%s21 + $0xaf0] sm:%s14]
        %374 = vst [vmem:[%s22 + $0xaf0] sm:%s14] %v373
        %v375 = vld [vmem:[%s21 + $0xb00] sm:%s14]
        %376 = vst [vmem:[%s22 + $0xb00] sm:%s14] %v375
        %v377 = vld [vmem:[%s21 + $0xb10] sm:%s14]
        %378 = vst [vmem:[%s22 + $0xb10] sm:%s14] %v377
        %v379 = vld [vmem:[%s21 + $0xb20] sm:%s14]
        %380 = vst [vmem:[%s22 + $0xb20] sm:%s14] %v379
        %v381 = vld [vmem:[%s21 + $0xb30] sm:%s14]
        %382 = vst [vmem:[%s22 + $0xb30] sm:%s14] %v381
        %v383 = vld [vmem:[%s21 + $0xb40] sm:%s14]
        %384 = vst [vmem:[%s22 + $0xb40] sm:%s14] %v383
        %v385 = vld [vmem:[%s21 + $0xb50] sm:%s14]
        %386 = vst [vmem:[%s22 + $0xb50] sm:%s14] %v385
        %v387 = vld [vmem:[%s21 + $0xb60] sm:%s14]
        %388 = vst [vmem:[%s22 + $0xb60] sm:%s14] %v387
        %v389 = vld [vmem:[%s21 + $0xb70] sm:%s14]
        %390 = vst [vmem:[%s22 + $0xb70] sm:%s14] %v389
        %v391 = vld [vmem:[%s21 + $0xb80] sm:%s14]
        %392 = vst [vmem:[%s22 + $0xb80] sm:%s14] %v391
        %v393 = vld [vmem:[%s21 + $0xb90] sm:%s14]
        %394 = vst [vmem:[%s22 + $0xb90] sm:%s14] %v393
        %v395 = vld [vmem:[%s21 + $0xba0] sm:%s14]
        %396 = vst [vmem:[%s22 + $0xba0] sm:%s14] %v395
        %v397 = vld [vmem:[%s21 + $0xbb0] sm:%s14]
        %398 = vst [vmem:[%s22 + $0xbb0] sm:%s14] %v397
        %v399 = vld [vmem:[%s21 + $0xbc0] sm:%s14]
        %400 = vst [vmem:[%s22 + $0xbc0] sm:%s14] %v399
        %v401 = vld [vmem:[%s21 + $0xbd0] sm:%s14]
        %402 = vst [vmem:[%s22 + $0xbd0] sm:%s14] %v401
        %v403 = vld [vmem:[%s21 + $0xbe0] sm:%s14]
        %404 = vst [vmem:[%s22 + $0xbe0] sm:%s14] %v403
        %v405 = vld [vmem:[%s21 + $0xbf0] sm:%s14]
        %406 = vst [vmem:[%s22 + $0xbf0] sm:%s14] %v405
        %v407 = vld [vmem:[%s21 + $0xc00] sm:%s14]
        %408 = vst [vmem:[%s22 + $0xc00] sm:%s14] %v407
        %v409 = vld [vmem:[%s21 + $0xc10] sm:%s14]
        %410 = vst [vmem:[%s22 + $0xc10] sm:%s14] %v409
        %v411 = vld [vmem:[%s21 + $0xc20] sm:%s14]
        %412 = vst [vmem:[%s22 + $0xc20] sm:%s14] %v411
        %v413 = vld [vmem:[%s21 + $0xc30] sm:%s14]
        %414 = vst [vmem:[%s22 + $0xc30] sm:%s14] %v413
        %v415 = vld [vmem:[%s21 + $0xc40] sm:%s14]
        %416 = vst [vmem:[%s22 + $0xc40] sm:%s14] %v415
        %v417 = vld [vmem:[%s21 + $0xc50] sm:%s14]
        %418 = vst [vmem:[%s22 + $0xc50] sm:%s14] %v417
        %v419 = vld [vmem:[%s21 + $0xc60] sm:%s14]
        %420 = vst [vmem:[%s22 + $0xc60] sm:%s14] %v419
        %v421 = vld [vmem:[%s21 + $0xc70] sm:%s14]
        %422 = vst [vmem:[%s22 + $0xc70] sm:%s14] %v421
        %v423 = vld [vmem:[%s21 + $0xc80] sm:%s14]
        %424 = vst [vmem:[%s22 + $0xc80] sm:%s14] %v423
        %v425 = vld [vmem:[%s21 + $0xc90] sm:%s14]
        %426 = vst [vmem:[%s22 + $0xc90] sm:%s14] %v425
        %v427 = vld [vmem:[%s21 + $0xca0] sm:%s14]
        %428 = vst [vmem:[%s22 + $0xca0] sm:%s14] %v427
        %v429 = vld [vmem:[%s21 + $0xcb0] sm:%s14]
        %430 = vst [vmem:[%s22 + $0xcb0] sm:%s14] %v429
        %v431 = vld [vmem:[%s21 + $0xcc0] sm:%s14]
        %432 = vst [vmem:[%s22 + $0xcc0] sm:%s14] %v431
        %v433 = vld [vmem:[%s21 + $0xcd0] sm:%s14]
        %434 = vst [vmem:[%s22 + $0xcd0] sm:%s14] %v433
        %v435 = vld [vmem:[%s21 + $0xce0] sm:%s14]
        %436 = vst [vmem:[%s22 + $0xce0] sm:%s14] %v435
        %v437 = vld [vmem:[%s21 + $0xcf0] sm:%s14]
        %438 = vst [vmem:[%s22 + $0xcf0] sm:%s14] %v437
        %v439 = vld [vmem:[%s21 + $0xd00] sm:%s14]
        %440 = vst [vmem:[%s22 + $0xd00] sm:%s14] %v439
        %v441 = vld [vmem:[%s21 + $0xd10] sm:%s14]
        %442 = vst [vmem:[%s22 + $0xd10] sm:%s14] %v441
        %v443 = vld [vmem:[%s21 + $0xd20] sm:%s14]
        %444 = vst [vmem:[%s22 + $0xd20] sm:%s14] %v443
        %v445 = vld [vmem:[%s21 + $0xd30] sm:%s14]
        %446 = vst [vmem:[%s22 + $0xd30] sm:%s14] %v445
        %v447 = vld [vmem:[%s21 + $0xd40] sm:%s14]
        %448 = vst [vmem:[%s22 + $0xd40] sm:%s14] %v447
        %v449 = vld [vmem:[%s21 + $0xd50] sm:%s14]
        %450 = vst [vmem:[%s22 + $0xd50] sm:%s14] %v449
        %v451 = vld [vmem:[%s21 + $0xd60] sm:%s14]
        %452 = vst [vmem:[%s22 + $0xd60] sm:%s14] %v451
        %v453 = vld [vmem:[%s21 + $0xd70] sm:%s14]
        %454 = vst [vmem:[%s22 + $0xd70] sm:%s14] %v453
        %v455 = vld [vmem:[%s21 + $0xd80] sm:%s14]
        %456 = vst [vmem:[%s22 + $0xd80] sm:%s14] %v455
        %v457 = vld [vmem:[%s21 + $0xd90] sm:%s14]
        %458 = vst [vmem:[%s22 + $0xd90] sm:%s14] %v457
        %v459 = vld [vmem:[%s21 + $0xda0] sm:%s14]
        %460 = vst [vmem:[%s22 + $0xda0] sm:%s14] %v459
        %v461 = vld [vmem:[%s21 + $0xdb0] sm:%s14]
        %462 = vst [vmem:[%s22 + $0xdb0] sm:%s14] %v461
        %v463 = vld [vmem:[%s21 + $0xdc0] sm:%s14]
        %464 = vst [vmem:[%s22 + $0xdc0] sm:%s14] %v463
        %v465 = vld [vmem:[%s21 + $0xdd0] sm:%s14]
        %466 = vst [vmem:[%s22 + $0xdd0] sm:%s14] %v465
        %v467 = vld [vmem:[%s21 + $0xde0] sm:%s14]
        %468 = vst [vmem:[%s22 + $0xde0] sm:%s14] %v467
        %v469 = vld [vmem:[%s21 + $0xdf0] sm:%s14]
        %470 = vst [vmem:[%s22 + $0xdf0] sm:%s14] %v469
        %v471 = vld [vmem:[%s21 + $0xe00] sm:%s14]
        %472 = vst [vmem:[%s22 + $0xe00] sm:%s14] %v471
        %v473 = vld [vmem:[%s21 + $0xe10] sm:%s14]
        %474 = vst [vmem:[%s22 + $0xe10] sm:%s14] %v473
        %v475 = vld [vmem:[%s21 + $0xe20] sm:%s14]
        %476 = vst [vmem:[%s22 + $0xe20] sm:%s14] %v475
        %v477 = vld [vmem:[%s21 + $0xe30] sm:%s14]
        %478 = vst [vmem:[%s22 + $0xe30] sm:%s14] %v477
        %v479 = vld [vmem:[%s21 + $0xe40] sm:%s14]
        %480 = vst [vmem:[%s22 + $0xe40] sm:%s14] %v479
        %v481 = vld [vmem:[%s21 + $0xe50] sm:%s14]
        %482 = vst [vmem:[%s22 + $0xe50] sm:%s14] %v481
        %v483 = vld [vmem:[%s21 + $0xe60] sm:%s14]
        %484 = vst [vmem:[%s22 + $0xe60] sm:%s14] %v483
        %v485 = vld [vmem:[%s21 + $0xe70] sm:%s14]
        %486 = vst [vmem:[%s22 + $0xe70] sm:%s14] %v485
        %v487 = vld [vmem:[%s21 + $0xe80] sm:%s14]
        %488 = vst [vmem:[%s22 + $0xe80] sm:%s14] %v487
        %v489 = vld [vmem:[%s21 + $0xe90] sm:%s14]
        %490 = vst [vmem:[%s22 + $0xe90] sm:%s14] %v489
        %v491 = vld [vmem:[%s21 + $0xea0] sm:%s14]
        %492 = vst [vmem:[%s22 + $0xea0] sm:%s14] %v491
        %v493 = vld [vmem:[%s21 + $0xeb0] sm:%s14]
        %494 = vst [vmem:[%s22 + $0xeb0] sm:%s14] %v493
        %v495 = vld [vmem:[%s21 + $0xec0] sm:%s14]
        %496 = vst [vmem:[%s22 + $0xec0] sm:%s14] %v495
        %v497 = vld [vmem:[%s21 + $0xed0] sm:%s14]
        %498 = vst [vmem:[%s22 + $0xed0] sm:%s14] %v497
        %v499 = vld [vmem:[%s21 + $0xee0] sm:%s14]
        %500 = vst [vmem:[%s22 + $0xee0] sm:%s14] %v499
        %v501 = vld [vmem:[%s21 + $0xef0] sm:%s14]
        %502 = vst [vmem:[%s22 + $0xef0] sm:%s14] %v501
        %v503 = vld [vmem:[%s21 + $0xf00] sm:%s14]
        %504 = vst [vmem:[%s22 + $0xf00] sm:%s14] %v503
        %v505 = vld [vmem:[%s21 + $0xf10] sm:%s14]
        %506 = vst [vmem:[%s22 + $0xf10] sm:%s14] %v505
        %v507 = vld [vmem:[%s21 + $0xf20] sm:%s14]
        %508 = vst [vmem:[%s22 + $0xf20] sm:%s14] %v507
        %v509 = vld [vmem:[%s21 + $0xf30] sm:%s14]
        %510 = vst [vmem:[%s22 + $0xf30] sm:%s14] %v509
        %v511 = vld [vmem:[%s21 + $0xf40] sm:%s14]
        %512 = vst [vmem:[%s22 + $0xf40] sm:%s14] %v511
        %v513 = vld [vmem:[%s21 + $0xf50] sm:%s14]
        %514 = vst [vmem:[%s22 + $0xf50] sm:%s14] %v513
        %v515 = vld [vmem:[%s21 + $0xf60] sm:%s14]
        %516 = vst [vmem:[%s22 + $0xf60] sm:%s14] %v515
        %v517 = vld [vmem:[%s21 + $0xf70] sm:%s14]
        %518 = vst [vmem:[%s22 + $0xf70] sm:%s14] %v517
        %v519 = vld [vmem:[%s21 + $0xf80] sm:%s14]
        %520 = vst [vmem:[%s22 + $0xf80] sm:%s14] %v519
        %v521 = vld [vmem:[%s21 + $0xf90] sm:%s14]
        %522 = vst [vmem:[%s22 + $0xf90] sm:%s14] %v521
        %v523 = vld [vmem:[%s21 + $0xfa0] sm:%s14]
        %524 = vst [vmem:[%s22 + $0xfa0] sm:%s14] %v523
        %v525 = vld [vmem:[%s21 + $0xfb0] sm:%s14]
        %526 = vst [vmem:[%s22 + $0xfb0] sm:%s14] %v525
        %v527 = vld [vmem:[%s21 + $0xfc0] sm:%s14]
        %528 = vst [vmem:[%s22 + $0xfc0] sm:%s14] %v527
        %v529 = vld [vmem:[%s21 + $0xfd0] sm:%s14]
        %530 = vst [vmem:[%s22 + $0xfd0] sm:%s14] %v529
        %v531 = vld [vmem:[%s21 + $0xfe0] sm:%s14]
        %532 = vst [vmem:[%s22 + $0xfe0] sm:%s14] %v531
        %v533 = vld [vmem:[%s21 + $0xff0] sm:%s14]
        %534 = vst [vmem:[%s22 + $0xff0] sm:%s14] %v533
        %v535 = vld [vmem:[%s21 + $0x1000] sm:%s14]
        %536 = vst [vmem:[%s22 + $0x1000] sm:%s14] %v535
        %v537 = vld [vmem:[%s21 + $0x1010] sm:%s14]
        %538 = vst [vmem:[%s22 + $0x1010] sm:%s14] %v537
        %v539 = vld [vmem:[%s21 + $0x1020] sm:%s14]
        %540 = vst [vmem:[%s22 + $0x1020] sm:%s14] %v539
        %v541 = vld [vmem:[%s21 + $0x1030] sm:%s14]
        %542 = vst [vmem:[%s22 + $0x1030] sm:%s14] %v541
        %v543 = vld [vmem:[%s21 + $0x1040] sm:%s14]
        %544 = vst [vmem:[%s22 + $0x1040] sm:%s14] %v543
        %v545 = vld [vmem:[%s21 + $0x1050] sm:%s14]
        %546 = vst [vmem:[%s22 + $0x1050] sm:%s14] %v545
        %v547 = vld [vmem:[%s21 + $0x1060] sm:%s14]
        %548 = vst [vmem:[%s22 + $0x1060] sm:%s14] %v547
        %v549 = vld [vmem:[%s21 + $0x1070] sm:%s14]
        %550 = vst [vmem:[%s22 + $0x1070] sm:%s14] %v549
        %v551 = vld [vmem:[%s21 + $0x1080] sm:%s14]
        %552 = vst [vmem:[%s22 + $0x1080] sm:%s14] %v551
        %v553 = vld [vmem:[%s21 + $0x1090] sm:%s14]
        %554 = vst [vmem:[%s22 + $0x1090] sm:%s14] %v553
        %v555 = vld [vmem:[%s21 + $0x10a0] sm:%s14]
        %556 = vst [vmem:[%s22 + $0x10a0] sm:%s14] %v555
        %v557 = vld [vmem:[%s21 + $0x10b0] sm:%s14]
        %558 = vst [vmem:[%s22 + $0x10b0] sm:%s14] %v557
        %v559 = vld [vmem:[%s21 + $0x10c0] sm:%s14]
        %560 = vst [vmem:[%s22 + $0x10c0] sm:%s14] %v559
        %v561 = vld [vmem:[%s21 + $0x10d0] sm:%s14]
        %562 = vst [vmem:[%s22 + $0x10d0] sm:%s14] %v561
        %v563 = vld [vmem:[%s21 + $0x10e0] sm:%s14]
        %564 = vst [vmem:[%s22 + $0x10e0] sm:%s14] %v563
        %v565 = vld [vmem:[%s21 + $0x10f0] sm:%s14]
        %566 = vst [vmem:[%s22 + $0x10f0] sm:%s14] %v565
        %v567 = vld [vmem:[%s21 + $0x1100] sm:%s14]
        %568 = vst [vmem:[%s22 + $0x1100] sm:%s14] %v567
        %v569 = vld [vmem:[%s21 + $0x1110] sm:%s14]
        %570 = vst [vmem:[%s22 + $0x1110] sm:%s14] %v569
        %v571 = vld [vmem:[%s21 + $0x1120] sm:%s14]
        %572 = vst [vmem:[%s22 + $0x1120] sm:%s14] %v571
        %v573 = vld [vmem:[%s21 + $0x1130] sm:%s14]
        %574 = vst [vmem:[%s22 + $0x1130] sm:%s14] %v573
        %v575 = vld [vmem:[%s21 + $0x1140] sm:%s14]
        %576 = vst [vmem:[%s22 + $0x1140] sm:%s14] %v575
        %v577 = vld [vmem:[%s21 + $0x1150] sm:%s14]
        %578 = vst [vmem:[%s22 + $0x1150] sm:%s14] %v577
        %v579 = vld [vmem:[%s21 + $0x1160] sm:%s14]
        %580 = vst [vmem:[%s22 + $0x1160] sm:%s14] %v579
        %v581 = vld [vmem:[%s21 + $0x1170] sm:%s14]
        %582 = vst [vmem:[%s22 + $0x1170] sm:%s14] %v581
        %v583 = vld [vmem:[%s21 + $0x1180] sm:%s14]
        %584 = vst [vmem:[%s22 + $0x1180] sm:%s14] %v583
        %v585 = vld [vmem:[%s21 + $0x1190] sm:%s14]
        %586 = vst [vmem:[%s22 + $0x1190] sm:%s14] %v585
        %v587 = vld [vmem:[%s21 + $0x11a0] sm:%s14]
        %588 = vst [vmem:[%s22 + $0x11a0] sm:%s14] %v587
        %v589 = vld [vmem:[%s21 + $0x11b0] sm:%s14]
        %590 = vst [vmem:[%s22 + $0x11b0] sm:%s14] %v589
        %v591 = vld [vmem:[%s21 + $0x11c0] sm:%s14]
        %592 = vst [vmem:[%s22 + $0x11c0] sm:%s14] %v591
        %v593 = vld [vmem:[%s21 + $0x11d0] sm:%s14]
        %594 = vst [vmem:[%s22 + $0x11d0] sm:%s14] %v593
        %v595 = vld [vmem:[%s21 + $0x11e0] sm:%s14]
        %596 = vst [vmem:[%s22 + $0x11e0] sm:%s14] %v595
        %v597 = vld [vmem:[%s21 + $0x11f0] sm:%s14]
        %598 = vst [vmem:[%s22 + $0x11f0] sm:%s14] %v597
        %v599 = vld [vmem:[%s21 + $0x1200] sm:%s14]
        %600 = vst [vmem:[%s22 + $0x1200] sm:%s14] %v599
        %v601 = vld [vmem:[%s21 + $0x1210] sm:%s14]
        %602 = vst [vmem:[%s22 + $0x1210] sm:%s14] %v601
        %v603 = vld [vmem:[%s21 + $0x1220] sm:%s14]
        %604 = vst [vmem:[%s22 + $0x1220] sm:%s14] %v603
        %v605 = vld [vmem:[%s21 + $0x1230] sm:%s14]
        %606 = vst [vmem:[%s22 + $0x1230] sm:%s14] %v605
        %v607 = vld [vmem:[%s21 + $0x1240] sm:%s14]
        %608 = vst [vmem:[%s22 + $0x1240] sm:%s14] %v607
        %v609 = vld [vmem:[%s21 + $0x1250] sm:%s14]
        %610 = vst [vmem:[%s22 + $0x1250] sm:%s14] %v609
        %v611 = vld [vmem:[%s21 + $0x1260] sm:%s14]
        %612 = vst [vmem:[%s22 + $0x1260] sm:%s14] %v611
        %v613 = vld [vmem:[%s21 + $0x1270] sm:%s14]
        %614 = vst [vmem:[%s22 + $0x1270] sm:%s14] %v613
        %v615 = vld [vmem:[%s21 + $0x1280] sm:%s14]
        %616 = vst [vmem:[%s22 + $0x1280] sm:%s14] %v615
        %v617 = vld [vmem:[%s21 + $0x1290] sm:%s14]
        %618 = vst [vmem:[%s22 + $0x1290] sm:%s14] %v617
        %v619 = vld [vmem:[%s21 + $0x12a0] sm:%s14]
        %620 = vst [vmem:[%s22 + $0x12a0] sm:%s14] %v619
        %v621 = vld [vmem:[%s21 + $0x12b0] sm:%s14]
        %622 = vst [vmem:[%s22 + $0x12b0] sm:%s14] %v621
        %v623 = vld [vmem:[%s21 + $0x12c0] sm:%s14]
        %624 = vst [vmem:[%s22 + $0x12c0] sm:%s14] %v623
        %v625 = vld [vmem:[%s21 + $0x12d0] sm:%s14]
        %626 = vst [vmem:[%s22 + $0x12d0] sm:%s14] %v625
        %v627 = vld [vmem:[%s21 + $0x12e0] sm:%s14]
        %628 = vst [vmem:[%s22 + $0x12e0] sm:%s14] %v627
        %v629 = vld [vmem:[%s21 + $0x12f0] sm:%s14]
        %630 = vst [vmem:[%s22 + $0x12f0] sm:%s14] %v629
        %v631 = vld [vmem:[%s21 + $0x1300] sm:%s14]
        %632 = vst [vmem:[%s22 + $0x1300] sm:%s14] %v631
        %v633 = vld [vmem:[%s21 + $0x1310] sm:%s14]
        %634 = vst [vmem:[%s22 + $0x1310] sm:%s14] %v633
        %v635 = vld [vmem:[%s21 + $0x1320] sm:%s14]
        %636 = vst [vmem:[%s22 + $0x1320] sm:%s14] %v635
        %v637 = vld [vmem:[%s21 + $0x1330] sm:%s14]
        %638 = vst [vmem:[%s22 + $0x1330] sm:%s14] %v637
        %v639 = vld [vmem:[%s21 + $0x1340] sm:%s14]
        %640 = vst [vmem:[%s22 + $0x1340] sm:%s14] %v639
        %v641 = vld [vmem:[%s21 + $0x1350] sm:%s14]
        %642 = vst [vmem:[%s22 + $0x1350] sm:%s14] %v641
        %v643 = vld [vmem:[%s21 + $0x1360] sm:%s14]
        %644 = vst [vmem:[%s22 + $0x1360] sm:%s14] %v643
        %v645 = vld [vmem:[%s21 + $0x1370] sm:%s14]
        %646 = vst [vmem:[%s22 + $0x1370] sm:%s14] %v645
        %v647 = vld [vmem:[%s21 + $0x1380] sm:%s14]
        %648 = vst [vmem:[%s22 + $0x1380] sm:%s14] %v647
        %v649 = vld [vmem:[%s21 + $0x1390] sm:%s14]
        %650 = vst [vmem:[%s22 + $0x1390] sm:%s14] %v649
        %v651 = vld [vmem:[%s21 + $0x13a0] sm:%s14]
        %652 = vst [vmem:[%s22 + $0x13a0] sm:%s14] %v651
        %v653 = vld [vmem:[%s21 + $0x13b0] sm:%s14]
        %654 = vst [vmem:[%s22 + $0x13b0] sm:%s14] %v653
        %v655 = vld [vmem:[%s21 + $0x13c0] sm:%s14]
        %656 = vst [vmem:[%s22 + $0x13c0] sm:%s14] %v655
        %v657 = vld [vmem:[%s21 + $0x13d0] sm:%s14]
        %658 = vst [vmem:[%s22 + $0x13d0] sm:%s14] %v657
        %v659 = vld [vmem:[%s21 + $0x13e0] sm:%s14]
        %660 = vst [vmem:[%s22 + $0x13e0] sm:%s14] %v659
        %v661 = vld [vmem:[%s21 + $0x13f0] sm:%s14]
        %662 = vst [vmem:[%s22 + $0x13f0] sm:%s14] %v661
        %v663 = vld [vmem:[%s21 + $0x1400] sm:%s14]
        %664 = vst [vmem:[%s22 + $0x1400] sm:%s14] %v663
        %v665 = vld [vmem:[%s21 + $0x1410] sm:%s14]
        %666 = vst [vmem:[%s22 + $0x1410] sm:%s14] %v665
        %v667 = vld [vmem:[%s21 + $0x1420] sm:%s14]
        %668 = vst [vmem:[%s22 + $0x1420] sm:%s14] %v667
        %v669 = vld [vmem:[%s21 + $0x1430] sm:%s14]
        %670 = vst [vmem:[%s22 + $0x1430] sm:%s14] %v669
        %v671 = vld [vmem:[%s21 + $0x1440] sm:%s14]
        %672 = vst [vmem:[%s22 + $0x1440] sm:%s14] %v671
        %v673 = vld [vmem:[%s21 + $0x1450] sm:%s14]
        %674 = vst [vmem:[%s22 + $0x1450] sm:%s14] %v673
        %v675 = vld [vmem:[%s21 + $0x1460] sm:%s14]
        %676 = vst [vmem:[%s22 + $0x1460] sm:%s14] %v675
        %v677 = vld [vmem:[%s21 + $0x1470] sm:%s14]
        %678 = vst [vmem:[%s22 + $0x1470] sm:%s14] %v677
        %v679 = vld [vmem:[%s21 + $0x1480] sm:%s14]
        %680 = vst [vmem:[%s22 + $0x1480] sm:%s14] %v679
        %v681 = vld [vmem:[%s21 + $0x1490] sm:%s14]
        %682 = vst [vmem:[%s22 + $0x1490] sm:%s14] %v681
        %v683 = vld [vmem:[%s21 + $0x14a0] sm:%s14]
        %684 = vst [vmem:[%s22 + $0x14a0] sm:%s14] %v683
        %v685 = vld [vmem:[%s21 + $0x14b0] sm:%s14]
        %686 = vst [vmem:[%s22 + $0x14b0] sm:%s14] %v685
        %v687 = vld [vmem:[%s21 + $0x14c0] sm:%s14]
        %688 = vst [vmem:[%s22 + $0x14c0] sm:%s14] %v687
        %v689 = vld [vmem:[%s21 + $0x14d0] sm:%s14]
        %690 = vst [vmem:[%s22 + $0x14d0] sm:%s14] %v689
        %v691 = vld [vmem:[%s21 + $0x14e0] sm:%s14]
        %692 = vst [vmem:[%s22 + $0x14e0] sm:%s14] %v691
        %v693 = vld [vmem:[%s21 + $0x14f0] sm:%s14]
        %694 = vst [vmem:[%s22 + $0x14f0] sm:%s14] %v693
        %v695 = vld [vmem:[%s21 + $0x1500] sm:%s14]
        %696 = vst [vmem:[%s22 + $0x1500] sm:%s14] %v695
        %v697 = vld [vmem:[%s21 + $0x1510] sm:%s14]
        %698 = vst [vmem:[%s22 + $0x1510] sm:%s14] %v697
        %v699 = vld [vmem:[%s21 + $0x1520] sm:%s14]
        %700 = vst [vmem:[%s22 + $0x1520] sm:%s14] %v699
        %v701 = vld [vmem:[%s21 + $0x1530] sm:%s14]
        %702 = vst [vmem:[%s22 + $0x1530] sm:%s14] %v701
        %v703 = vld [vmem:[%s21 + $0x1540] sm:%s14]
        %704 = vst [vmem:[%s22 + $0x1540] sm:%s14] %v703
        %v705 = vld [vmem:[%s21 + $0x1550] sm:%s14]
        %706 = vst [vmem:[%s22 + $0x1550] sm:%s14] %v705
        %v707 = vld [vmem:[%s21 + $0x1560] sm:%s14]
        %708 = vst [vmem:[%s22 + $0x1560] sm:%s14] %v707
        %v709 = vld [vmem:[%s21 + $0x1570] sm:%s14]
        %710 = vst [vmem:[%s22 + $0x1570] sm:%s14] %v709
        %v711 = vld [vmem:[%s21 + $0x1580] sm:%s14]
        %712 = vst [vmem:[%s22 + $0x1580] sm:%s14] %v711
        %v713 = vld [vmem:[%s21 + $0x1590] sm:%s14]
        %714 = vst [vmem:[%s22 + $0x1590] sm:%s14] %v713
        %v715 = vld [vmem:[%s21 + $0x15a0] sm:%s14]
        %716 = vst [vmem:[%s22 + $0x15a0] sm:%s14] %v715
        %v717 = vld [vmem:[%s21 + $0x15b0] sm:%s14]
        %718 = vst [vmem:[%s22 + $0x15b0] sm:%s14] %v717
        %v719 = vld [vmem:[%s21 + $0x15c0] sm:%s14]
        %720 = vst [vmem:[%s22 + $0x15c0] sm:%s14] %v719
        %v721 = vld [vmem:[%s21 + $0x15d0] sm:%s14]
        %722 = vst [vmem:[%s22 + $0x15d0] sm:%s14] %v721
        %v723 = vld [vmem:[%s21 + $0x15e0] sm:%s14]
        %724 = vst [vmem:[%s22 + $0x15e0] sm:%s14] %v723
        %v725 = vld [vmem:[%s21 + $0x15f0] sm:%s14]
        %726 = vst [vmem:[%s22 + $0x15f0] sm:%s14] %v725
      $region15: #{tpu_custom_call.1} parent=9 // loop_footer
        %s20 = sadd.s32 1, %s16
      $region16: #{tpu_custom_call.1} parent=9 // loop_footer_branch
        %15 = sbr.rel target = $region12
      $region17: #{tpu_custom_call.1} parent=9 // loop_exit
        _
    $region10: #{tpu_custom_call.1} parent=2 // pred_fallthru
      _
    // Predicated region
    $region36: #{tpu_custom_call.1} parent=2 // pred_check
      _
    $region37: #{tpu_custom_call.1} parent=2 // pred_check_branch
      %2164 = sbr.rel (0) target = $region39
    $region38: #{tpu_custom_call.1} parent=2 // pred_region
      %2165 = vsyncadd [#allocation2], 78848
    $region39: #{tpu_custom_call.1} parent=2 // pred_fallthru
      _
    %s2166 = smul.u32 1, 352
    %s2167 = smul.u32 %s2166, 14
    %s2168 = smul.u32 %s2167, 1
    %s2169 = sshll.u32 %s2168, 4
    %2170 = dma.done [#allocation2], %s2169

</llo_original>
